<compile_context>
chip_gen: v7x
topology: tpu7x:2x2x1
jax: 0.10.0
libtpu: 0.0.40
codegen_flags: <defaults>
</compile_context>

<pallas_src>
import functools

import numpy as np

import jax
import jax.numpy as jnp
from jax.experimental import pallas as pl
from jax.experimental.pallas import tpu as pltpu


def _cbam_kernel(x_ref, w1t_ref, w2t_ref, cmask_ref, rmask_ref, wtap_ref, o_ref,
                 *, W, K):
    Bt, C, HW = x_ref.shape
    P = K // 2
    f32 = jnp.float32

    # ---------------- channel attention ----------------
    xv = x_ref[...]                                      # (Bt, C, HW) native dtype
    mx = jnp.max(xv, axis=2).astype(f32)                 # (Bt, C) global max pool
    av = jnp.sum(xv.astype(f32), axis=2) * (1.0 / HW)    # (Bt, C) global avg pool

    # Fused MLP: one matmul pair for both pooled vectors.
    pooled = jnp.concatenate([mx, av], axis=0)           # (2*Bt, C)
    h = jnp.maximum(
        jnp.dot(pooled, w1t_ref[...], preferred_element_type=f32), 0.0)
    out2 = jnp.dot(h, w2t_ref[...], preferred_element_type=f32)   # (2*Bt, C)
    ch = jax.nn.sigmoid(out2[:Bt] + out2[Bt:])           # (Bt, C)

    # Channel rescale written straight into the output block (output dtype).
    o_ref[...] = (xv * ch[:, :, None].astype(xv.dtype)).astype(o_ref.dtype)

    # ---------------- spatial attention ----------------
    y = o_ref[...]                                       # re-read channel-scaled x
    mx_c = jnp.max(y, axis=1).astype(f32)                # (Bt, HW) channel max
    av_c = jnp.sum(y.astype(f32), axis=1) * (1.0 / C)    # (Bt, HW) channel mean

    # Separable KxK conv in flat H*W space.
    # Stage 1: 7 column rolls (shift dx-P) masked by the col-validity rows.
    crm = []
    cra = []
    for dx in range(K):
        s = dx - P
        if s == 0:
            rm, ra = mx_c, av_c
        else:
            sh = (-s) % HW                               # rolled[i] = map[i + s]
            rm = pltpu.roll(mx_c, sh, axis=1)
            ra = pltpu.roll(av_c, sh, axis=1)
        cmb = jnp.broadcast_to(cmask_ref[dx], (Bt, HW))  # one broadcast, reused
        crm.append(rm * cmb)
        cra.append(ra * cmb)

    # Stage 2+3: per-dy accumulation with SMEM scalar tap weights, then one
    # row roll (shift (dy-P)*W) masked by the row-validity rows.
    acc = None
    for dy in range(K):
        inner = None
        base = dy * K
        for dx in range(K):
            t = (wtap_ref[0, base + dx] * crm[dx] +
                 wtap_ref[1, base + dx] * cra[dx])
            inner = t if inner is None else inner + t
        s = (dy - P) * W
        if s != 0:
            inner = pltpu.roll(inner, (-s) % HW, axis=1)
        contrib = rmask_ref[dy] * inner
        acc = contrib if acc is None else acc + contrib

    sp = jax.nn.sigmoid(acc)                             # (Bt, HW)
    o_ref[...] = o_ref[...] * sp[:, None, :].astype(o_ref.dtype)


def _vmem_capacity_bytes():
    try:
        info = pltpu.get_tpu_info()
        cap = getattr(info, "vmem_capacity_bytes", None)
        if cap:
            return int(cap)
    except Exception:
        pass
    return None


def _pick_block_batch(B, C, HW, in_item, out_item, budget_bytes):
    """Largest divisor of B (preferring >=2 grid steps) whose VMEM use fits."""
    def need(bt):
        io = 2 * bt * C * HW * (in_item + out_item)      # double-buffered in + out
        temps = 2 * bt * C * HW * 4                      # transient f32 temporaries
        return io + temps
    hi = B // 2 if B >= 2 else B                         # keep the grid >= 2 steps
    for bt in range(hi, 0, -1):
        if B % bt == 0 and need(bt) <= budget_bytes:
            return bt
    return 1


def cbam_forward(x, w1, w2, wsp, *, block_batch=None):
    """x: (B,C,H,W); w1: (C//r, C); w2: (C, C//r); wsp: (1,2,K,K)."""
    B, C, H, W = x.shape
    Cr = w1.shape[0]
    K = wsp.shape[-1]
    P = K // 2
    HW = H * W
    # TODO(synk): for production shapes where H*W is not a multiple of 128,
    # pad HW to a lane-aligned width (with pool-safe masking); the kernel is
    # correct either way, just lane-sparse for such shapes.

    # Lane-dense view of the activations.
    x2 = x.reshape(B, C, HW)

    # Channel-MLP weights, transposed and zero-padded to a lane-aligned hidden
    # width (relu(0)=0 and zero rows of w2 keep the math exact).
    Crp = ((Cr + 127) // 128) * 128
    w1t = jnp.zeros((C, Crp), jnp.float32).at[:, :Cr].set(
        jnp.asarray(w1, jnp.float32).T)
    w2t = jnp.zeros((Crp, C), jnp.float32).at[:Cr, :].set(
        jnp.asarray(w2, jnp.float32).T)

    # Separable zero-padding masks for the KxK conv in flat H*W space.
    r = np.repeat(np.arange(H), W)                       # (HW,) row of flat pixel
    c = np.tile(np.arange(W), H)                         # (HW,) col of flat pixel
    d = np.arange(K) - P                                 # (K,)
    colmask = jnp.asarray(((c[None, :] + d[:, None] >= 0) &
                           (c[None, :] + d[:, None] < W)).astype(np.float32))
    rowmask = jnp.asarray(((r[None, :] + d[:, None] >= 0) &
                           (r[None, :] + d[:, None] < H)).astype(np.float32))

    # Raw tap weights (channel 0 = max map, 1 = avg map) -> SMEM scalars.
    w_taps = jnp.asarray(wsp, jnp.float32).reshape(2, K * K)

    # Generation-aware VMEM budgeting.
    cap = _vmem_capacity_bytes()
    if cap:
        vmem_limit = min(cap * 3 // 4, 96 * 1024 * 1024)
    else:
        vmem_limit = 32 * 1024 * 1024
    in_item = jnp.dtype(x.dtype).itemsize
    fixed = 2 * 4 * (w1t.size + w2t.size + colmask.size + rowmask.size) + 4096
    budget = max(vmem_limit - fixed - (4 << 20), 1 << 20)

    if block_batch is None:
        block_batch = _pick_block_batch(B, C, HW, in_item, in_item, budget)
    Bt = block_batch
    assert B % Bt == 0, "block_batch must divide B"

    kernel = functools.partial(_cbam_kernel, W=W, K=K)
    out = pl.pallas_call(
        kernel,
        out_shape=jax.ShapeDtypeStruct((B, C, HW), x.dtype),
        grid_spec=pltpu.PrefetchScalarGridSpec(
            num_scalar_prefetch=0,
            grid=(B // Bt,),
            in_specs=[
                pl.BlockSpec((Bt, C, HW), lambda b: (b, 0, 0)),
                pl.BlockSpec((C, Crp), lambda b: (0, 0)),
                pl.BlockSpec((Crp, C), lambda b: (0, 0)),
                pl.BlockSpec((K, HW), lambda b: (0, 0)),
                pl.BlockSpec((K, HW), lambda b: (0, 0)),
                pl.BlockSpec(memory_space=pltpu.MemorySpace.SMEM),
            ],
            out_specs=pl.BlockSpec((Bt, C, HW), lambda b: (b, 0, 0)),
        ),
        compiler_params=pltpu.CompilerParams(
            dimension_semantics=("parallel",),
            vmem_limit_bytes=int(vmem_limit)),
    )(x2, w1t, w2t, colmask, rowmask, w_taps)
    return out.reshape(B, C, H, W)


def cbam_reference(x, w1, w2, wsp):
    """Pure-JAX reference matching the PyTorch forward exactly."""
    B, C, H, W = x.shape
    K = wsp.shape[-1]
    P = K // 2
    mx = jnp.max(x, axis=(2, 3))                         # (B, C)
    av = jnp.mean(x, axis=(2, 3))                        # (B, C)

    def mlp(v):
        h = jnp.maximum(v @ w1.T, 0.0)
        return h @ w2.T

    ch = jax.nn.sigmoid(mlp(mx) + mlp(av))               # (B, C)
    xs = x * ch[:, :, None, None]

    mx_c = jnp.max(xs, axis=1)                           # (B, H, W)
    av_c = jnp.mean(xs, axis=1)                          # (B, H, W)
    m = jnp.stack([mx_c, av_c], axis=1)                  # (B, 2, H, W)
    mp = jnp.pad(m, ((0, 0), (0, 0), (P, P), (P, P)))
    conv = jnp.zeros((B, H, W), jnp.float32)
    for c in range(2):
        for dy in range(K):
            for dx in range(K):
                conv = conv + wsp[0, c, dy, dx] * mp[:, c, dy:dy + H, dx:dx + W]
    sp = jax.nn.sigmoid(conv)[:, None, :, :]
    return xs * sp


if __name__ == "__main__":
    B, C, H, W = 2, 32, 16, 16
    reduction, K = 16, 7
    Cr = C // reduction

    key = jax.random.PRNGKey(0)
    k1, k2, k3, kx = jax.random.split(key, 4)
    w1 = jax.random.normal(k1, (Cr, C), jnp.float32) * (1.0 / jnp.sqrt(C))
    w2 = jax.random.normal(k2, (C, Cr), jnp.float32) * (1.0 / jnp.sqrt(Cr))
    wsp = jax.random.normal(k3, (1, 2, K, K), jnp.float32) * (1.0 / jnp.sqrt(2.0 * K * K))
    x = jax.random.normal(kx, (B, C, H, W), jnp.float32)

    out = jax.block_until_ready(cbam_forward(x, w1, w2, wsp))
    ref = jax.block_until_ready(cbam_reference(x, w1, w2, wsp))

    assert out.shape == x.shape and out.dtype == x.dtype
    assert jnp.allclose(out, ref, rtol=1e-4, atol=1e-5), (
        float(jnp.max(jnp.abs(out - ref))))

    print("KERNEL_OK")
</pallas_src>

<mosaic_0001>
module attributes {stable_mosaic.version = 11 : i64} {
  func.func @_cbam_kernel(%arg0: i32, %arg1: memref<1x32x256xf32, #tpu.memory_space<vmem>>, %arg2: memref<32x128xf32, #tpu.memory_space<vmem>>, %arg3: memref<128x32xf32, #tpu.memory_space<vmem>>, %arg4: memref<7x256xf32, #tpu.memory_space<vmem>>, %arg5: memref<7x256xf32, #tpu.memory_space<vmem>>, %arg6: memref<2x49xf32, #tpu.memory_space<smem>>, %arg7: memref<1x32x256xf32, #tpu.memory_space<vmem>>) attributes {dimension_semantics = [#tpu.dimension_semantics<parallel>], iteration_bounds = array<i64: 2>, scalar_prefetch = 0 : i64, scratch_operands = 0 : i64, tpu.core_type = #tpu.core_type<tc>, window_params = [{transform_indices = @transform_0, window_bounds = array<i64: 1, 32, 256>}, {pipeline_mode = #tpu.pipeline_mode<synchronous>, transform_indices = @transform_1, window_bounds = array<i64: 32, 128>}, {pipeline_mode = #tpu.pipeline_mode<synchronous>, transform_indices = @transform_2, window_bounds = array<i64: 128, 32>}, {pipeline_mode = #tpu.pipeline_mode<synchronous>, transform_indices = @transform_3, window_bounds = array<i64: 7, 256>}, {pipeline_mode = #tpu.pipeline_mode<synchronous>, transform_indices = @transform_4, window_bounds = array<i64: 7, 256>}, {transform_indices = @transform_5, window_bounds = array<i64: 2, 49>}, {transform_indices = @transform_6, window_bounds = array<i64: 1, 32, 256>}]} {
    %c0 = arith.constant 0 : index
    %c0_0 = arith.constant 0 : index
    %c0_1 = arith.constant 0 : index
    %0 = vector.load %arg1[%c0, %c0_0, %c0_1] : memref<1x32x256xf32, #tpu.memory_space<vmem>>, vector<1x32x256xf32>
    %cst = arith.constant dense<0xFF800000> : vector<1x32xf32>
    %1 = vector.multi_reduction <maximumf>, %0, %cst [2] : vector<1x32x256xf32> to vector<1x32xf32>
    %cst_2 = arith.constant dense<0.000000e+00> : vector<1x32xf32>
    %2 = vector.multi_reduction <add>, %0, %cst_2 [2] : vector<1x32x256xf32> to vector<1x32xf32>
    %cst_3 = arith.constant 3.906250e-03 : f32
    %3 = vector.broadcast %cst_3 : f32 to vector<1x32xf32>
    %4 = arith.mulf %2, %3 : vector<1x32xf32>
    %5 = tpu.concatenate %1, %4 in 0 : vector<1x32xf32>, vector<1x32xf32> -> vector<2x32xf32>
    %c0_4 = arith.constant 0 : index
    %c0_5 = arith.constant 0 : index
    %6 = vector.load %arg2[%c0_4, %c0_5] : memref<32x128xf32, #tpu.memory_space<vmem>>, vector<32x128xf32>
    %cst_6 = arith.constant dense<0.000000e+00> : vector<2x128xf32>
    %7 = tpu.matmul %5, %6, %cst_6 {dimension_numbers = #tpu.dot_dimension_numbers<[1], [0], [0], [1], [0, 0, 1, 1], [], []>} : vector<2x32xf32>, vector<32x128xf32>, vector<2x128xf32> -> vector<2x128xf32>
    %cst_7 = arith.constant 0.000000e+00 : f32
    %8 = vector.broadcast %cst_7 : f32 to vector<2x128xf32>
    %9 = arith.maximumf %7, %8 : vector<2x128xf32>
    %c0_8 = arith.constant 0 : index
    %c0_9 = arith.constant 0 : index
    %10 = vector.load %arg3[%c0_8, %c0_9] : memref<128x32xf32, #tpu.memory_space<vmem>>, vector<128x32xf32>
    %cst_10 = arith.constant dense<0.000000e+00> : vector<2x32xf32>
    %11 = tpu.matmul %9, %10, %cst_10 {dimension_numbers = #tpu.dot_dimension_numbers<[1], [0], [0], [1], [0, 0, 1, 1], [], []>} : vector<2x128xf32>, vector<128x32xf32>, vector<2x32xf32> -> vector<2x32xf32>
    %12 = vector.extract_strided_slice %11 {offsets = [0, 0], sizes = [1, 32], strides = [1, 1]} : vector<2x32xf32> to vector<1x32xf32>
    %13 = vector.extract_strided_slice %11 {offsets = [1, 0], sizes = [1, 32], strides = [1, 1]} : vector<2x32xf32> to vector<1x32xf32>
    %14 = arith.addf %12, %13 : vector<1x32xf32>
    %15 = arith.negf %14 : vector<1x32xf32>
    %16 = math.exp %15 : vector<1x32xf32>
    %cst_11 = arith.constant 1.000000e+00 : f32
    %17 = vector.broadcast %cst_11 : f32 to vector<1x32xf32>
    %18 = arith.addf %17, %16 : vector<1x32xf32>
    %19 = arith.divf %17, %18 : vector<1x32xf32>
    %20 = vector.shape_cast %19 : vector<1x32xf32> to vector<1x32x1xf32>
    %21 = vector.broadcast %20 : vector<1x32x1xf32> to vector<1x32x256xf32>
    %22 = arith.mulf %0, %21 : vector<1x32x256xf32>
    %c0_12 = arith.constant 0 : index
    %c0_13 = arith.constant 0 : index
    %c0_14 = arith.constant 0 : index
    %23 = vector.load %arg7[%c0_12, %c0_13, %c0_14] : memref<1x32x256xf32, #tpu.memory_space<vmem>>, vector<1x32x256xf32>
    tpu.vector_store %arg7[%c0_12, %c0_13, %c0_14], %22 {strides = array<i32>} : memref<1x32x256xf32, #tpu.memory_space<vmem>>, vector<1x32x256xf32>,
    %c0_15 = arith.constant 0 : index
    %c0_16 = arith.constant 0 : index
    %c0_17 = arith.constant 0 : index
    %24 = vector.load %arg7[%c0_15, %c0_16, %c0_17] : memref<1x32x256xf32, #tpu.memory_space<vmem>>, vector<1x32x256xf32>
    %cst_18 = arith.constant dense<0xFF800000> : vector<1x256xf32>
    %25 = vector.multi_reduction <maximumf>, %24, %cst_18 [1] : vector<1x32x256xf32> to vector<1x256xf32>
    %cst_19 = arith.constant dense<0.000000e+00> : vector<1x256xf32>
    %26 = vector.multi_reduction <add>, %24, %cst_19 [1] : vector<1x32x256xf32> to vector<1x256xf32>
    %cst_20 = arith.constant 3.125000e-02 : f32
    %27 = vector.broadcast %cst_20 : f32 to vector<1x256xf32>
    %28 = arith.mulf %26, %27 : vector<1x256xf32>
    %c3_i32 = arith.constant 3 : i32
    %29 = tpu.dynamic_rotate %25 by %c3_i32 dim 1 : vector<1x256xf32>, i32 -> vector<1x256xf32>
    %c3_i32_21 = arith.constant 3 : i32
    %30 = tpu.dynamic_rotate %28 by %c3_i32_21 dim 1 : vector<1x256xf32>, i32 -> vector<1x256xf32>
    %c0_22 = arith.constant 0 : index
    %c0_23 = arith.constant 0 : index
    %31 = vector.load %arg4[%c0_22, %c0_23] : memref<7x256xf32, #tpu.memory_space<vmem>>, vector<1x256xf32>
    %32 = vector.shape_cast %31 : vector<1x256xf32> to vector<256xf32>
    %33 = vector.shape_cast %32 : vector<256xf32> to vector<1x256xf32>
    %34 = arith.mulf %29, %33 : vector<1x256xf32>
    %35 = arith.mulf %30, %33 : vector<1x256xf32>
    %c2_i32 = arith.constant 2 : i32
    %36 = tpu.dynamic_rotate %25 by %c2_i32 dim 1 : vector<1x256xf32>, i32 -> vector<1x256xf32>
    %c2_i32_24 = arith.constant 2 : i32
    %37 = tpu.dynamic_rotate %28 by %c2_i32_24 dim 1 : vector<1x256xf32>, i32 -> vector<1x256xf32>
    %c1 = arith.constant 1 : index
    %c0_25 = arith.constant 0 : index
    %38 = vector.load %arg4[%c1, %c0_25] : memref<7x256xf32, #tpu.memory_space<vmem>>, vector<1x256xf32>
    %39 = vector.shape_cast %38 : vector<1x256xf32> to vector<256xf32>
    %40 = vector.shape_cast %39 : vector<256xf32> to vector<1x256xf32>
    %41 = arith.mulf %36, %40 : vector<1x256xf32>
    %42 = arith.mulf %37, %40 : vector<1x256xf32>
    %c1_i32 = arith.constant 1 : i32
    %43 = tpu.dynamic_rotate %25 by %c1_i32 dim 1 : vector<1x256xf32>, i32 -> vector<1x256xf32>
    %c1_i32_26 = arith.constant 1 : i32
    %44 = tpu.dynamic_rotate %28 by %c1_i32_26 dim 1 : vector<1x256xf32>, i32 -> vector<1x256xf32>
    %c2 = arith.constant 2 : index
    %c0_27 = arith.constant 0 : index
    %45 = vector.load %arg4[%c2, %c0_27] : memref<7x256xf32, #tpu.memory_space<vmem>>, vector<1x256xf32>
    %46 = vector.shape_cast %45 : vector<1x256xf32> to vector<256xf32>
    %47 = vector.shape_cast %46 : vector<256xf32> to vector<1x256xf32>
    %48 = arith.mulf %43, %47 : vector<1x256xf32>
    %49 = arith.mulf %44, %47 : vector<1x256xf32>
    %c3 = arith.constant 3 : index
    %c0_28 = arith.constant 0 : index
    %50 = vector.load %arg4[%c3, %c0_28] : memref<7x256xf32, #tpu.memory_space<vmem>>, vector<1x256xf32>
    %51 = vector.shape_cast %50 : vector<1x256xf32> to vector<256xf32>
    %52 = vector.shape_cast %51 : vector<256xf32> to vector<1x256xf32>
    %53 = arith.mulf %25, %52 : vector<1x256xf32>
    %54 = arith.mulf %28, %52 : vector<1x256xf32>
    %c255_i32 = arith.constant 255 : i32
    %55 = tpu.dynamic_rotate %25 by %c255_i32 dim 1 : vector<1x256xf32>, i32 -> vector<1x256xf32>
    %c255_i32_29 = arith.constant 255 : i32
    %56 = tpu.dynamic_rotate %28 by %c255_i32_29 dim 1 : vector<1x256xf32>, i32 -> vector<1x256xf32>
    %c4 = arith.constant 4 : index
    %c0_30 = arith.constant 0 : index
    %57 = vector.load %arg4[%c4, %c0_30] : memref<7x256xf32, #tpu.memory_space<vmem>>, vector<1x256xf32>
    %58 = vector.shape_cast %57 : vector<1x256xf32> to vector<256xf32>
    %59 = vector.shape_cast %58 : vector<256xf32> to vector<1x256xf32>
    %60 = arith.mulf %55, %59 : vector<1x256xf32>
    %61 = arith.mulf %56, %59 : vector<1x256xf32>
    %c254_i32 = arith.constant 254 : i32
    %62 = tpu.dynamic_rotate %25 by %c254_i32 dim 1 : vector<1x256xf32>, i32 -> vector<1x256xf32>
    %c254_i32_31 = arith.constant 254 : i32
    %63 = tpu.dynamic_rotate %28 by %c254_i32_31 dim 1 : vector<1x256xf32>, i32 -> vector<1x256xf32>
    %c5 = arith.constant 5 : index
    %c0_32 = arith.constant 0 : index
    %64 = vector.load %arg4[%c5, %c0_32] : memref<7x256xf32, #tpu.memory_space<vmem>>, vector<1x256xf32>
    %65 = vector.shape_cast %64 : vector<1x256xf32> to vector<256xf32>
    %66 = vector.shape_cast %65 : vector<256xf32> to vector<1x256xf32>
    %67 = arith.mulf %62, %66 : vector<1x256xf32>
    %68 = arith.mulf %63, %66 : vector<1x256xf32>
    %c253_i32 = arith.constant 253 : i32
    %69 = tpu.dynamic_rotate %25 by %c253_i32 dim 1 : vector<1x256xf32>, i32 -> vector<1x256xf32>
    %c253_i32_33 = arith.constant 253 : i32
    %70 = tpu.dynamic_rotate %28 by %c253_i32_33 dim 1 : vector<1x256xf32>, i32 -> vector<1x256xf32>
    %c6 = arith.constant 6 : index
    %c0_34 = arith.constant 0 : index
    %71 = vector.load %arg4[%c6, %c0_34] : memref<7x256xf32, #tpu.memory_space<vmem>>, vector<1x256xf32>
    %72 = vector.shape_cast %71 : vector<1x256xf32> to vector<256xf32>
    %73 = vector.shape_cast %72 : vector<256xf32> to vector<1x256xf32>
    %74 = arith.mulf %69, %73 : vector<1x256xf32>
    %75 = arith.mulf %70, %73 : vector<1x256xf32>
    %c0_35 = arith.constant 0 : index
    %c0_36 = arith.constant 0 : index
    %76 = memref.load %arg6[%c0_35, %c0_36] : memref<2x49xf32, #tpu.memory_space<smem>>
    %77 = vector.broadcast %76 : f32 to vector<1x256xf32>
    %78 = arith.mulf %77, %34 : vector<1x256xf32>
    %c1_37 = arith.constant 1 : index
    %c0_38 = arith.constant 0 : index
    %79 = memref.load %arg6[%c1_37, %c0_38] : memref<2x49xf32, #tpu.memory_space<smem>>
    %80 = vector.broadcast %79 : f32 to vector<1x256xf32>
    %81 = arith.mulf %80, %35 : vector<1x256xf32>
    %82 = arith.addf %78, %81 : vector<1x256xf32>
    %c0_39 = arith.constant 0 : index
    %c1_40 = arith.constant 1 : index
    %83 = memref.load %arg6[%c0_39, %c1_40] : memref<2x49xf32, #tpu.memory_space<smem>>
    %84 = vector.broadcast %83 : f32 to vector<1x256xf32>
    %85 = arith.mulf %84, %41 : vector<1x256xf32>
    %c1_41 = arith.constant 1 : index
    %c1_42 = arith.constant 1 : index
    %86 = memref.load %arg6[%c1_41, %c1_42] : memref<2x49xf32, #tpu.memory_space<smem>>
    %87 = vector.broadcast %86 : f32 to vector<1x256xf32>
    %88 = arith.mulf %87, %42 : vector<1x256xf32>
    %89 = arith.addf %85, %88 : vector<1x256xf32>
    %90 = arith.addf %82, %89 : vector<1x256xf32>
    %c0_43 = arith.constant 0 : index
    %c2_44 = arith.constant 2 : index
    %91 = memref.load %arg6[%c0_43, %c2_44] : memref<2x49xf32, #tpu.memory_space<smem>>
    %92 = vector.broadcast %91 : f32 to vector<1x256xf32>
    %93 = arith.mulf %92, %48 : vector<1x256xf32>
    %c1_45 = arith.constant 1 : index
    %c2_46 = arith.constant 2 : index
    %94 = memref.load %arg6[%c1_45, %c2_46] : memref<2x49xf32, #tpu.memory_space<smem>>
    %95 = vector.broadcast %94 : f32 to vector<1x256xf32>
    %96 = arith.mulf %95, %49 : vector<1x256xf32>
    %97 = arith.addf %93, %96 : vector<1x256xf32>
    %98 = arith.addf %90, %97 : vector<1x256xf32>
    %c0_47 = arith.constant 0 : index
    %c3_48 = arith.constant 3 : index
    %99 = memref.load %arg6[%c0_47, %c3_48] : memref<2x49xf32, #tpu.memory_space<smem>>
    %100 = vector.broadcast %99 : f32 to vector<1x256xf32>
    %101 = arith.mulf %100, %53 : vector<1x256xf32>
    %c1_49 = arith.constant 1 : index
    %c3_50 = arith.constant 3 : index
    %102 = memref.load %arg6[%c1_49, %c3_50] : memref<2x49xf32, #tpu.memory_space<smem>>
    %103 = vector.broadcast %102 : f32 to vector<1x256xf32>
    %104 = arith.mulf %103, %54 : vector<1x256xf32>
    %105 = arith.addf %101, %104 : vector<1x256xf32>
    %106 = arith.addf %98, %105 : vector<1x256xf32>
    %c0_51 = arith.constant 0 : index
    %c4_52 = arith.constant 4 : index
    %107 = memref.load %arg6[%c0_51, %c4_52] : memref<2x49xf32, #tpu.memory_space<smem>>
    %108 = vector.broadcast %107 : f32 to vector<1x256xf32>
    %109 = arith.mulf %108, %60 : vector<1x256xf32>
    %c1_53 = arith.constant 1 : index
    %c4_54 = arith.constant 4 : index
    %110 = memref.load %arg6[%c1_53, %c4_54] : memref<2x49xf32, #tpu.memory_space<smem>>
    %111 = vector.broadcast %110 : f32 to vector<1x256xf32>
    %112 = arith.mulf %111, %61 : vector<1x256xf32>
    %113 = arith.addf %109, %112 : vector<1x256xf32>
    %114 = arith.addf %106, %113 : vector<1x256xf32>
    %c0_55 = arith.constant 0 : index
    %c5_56 = arith.constant 5 : index
    %115 = memref.load %arg6[%c0_55, %c5_56] : memref<2x49xf32, #tpu.memory_space<smem>>
    %116 = vector.broadcast %115 : f32 to vector<1x256xf32>
    %117 = arith.mulf %116, %67 : vector<1x256xf32>
    %c1_57 = arith.constant 1 : index
    %c5_58 = arith.constant 5 : index
    %118 = memref.load %arg6[%c1_57, %c5_58] : memref<2x49xf32, #tpu.memory_space<smem>>
    %119 = vector.broadcast %118 : f32 to vector<1x256xf32>
    %120 = arith.mulf %119, %68 : vector<1x256xf32>
    %121 = arith.addf %117, %120 : vector<1x256xf32>
    %122 = arith.addf %114, %121 : vector<1x256xf32>
    %c0_59 = arith.constant 0 : index
    %c6_60 = arith.constant 6 : index
    %123 = memref.load %arg6[%c0_59, %c6_60] : memref<2x49xf32, #tpu.memory_space<smem>>
    %124 = vector.broadcast %123 : f32 to vector<1x256xf32>
    %125 = arith.mulf %124, %74 : vector<1x256xf32>
    %c1_61 = arith.constant 1 : index
    %c6_62 = arith.constant 6 : index
    %126 = memref.load %arg6[%c1_61, %c6_62] : memref<2x49xf32, #tpu.memory_space<smem>>
    %127 = vector.broadcast %126 : f32 to vector<1x256xf32>
    %128 = arith.mulf %127, %75 : vector<1x256xf32>
    %129 = arith.addf %125, %128 : vector<1x256xf32>
    %130 = arith.addf %122, %129 : vector<1x256xf32>
    %c48_i32 = arith.constant 48 : i32
    %131 = tpu.dynamic_rotate %130 by %c48_i32 dim 1 : vector<1x256xf32>, i32 -> vector<1x256xf32>
    %c0_63 = arith.constant 0 : index
    %c0_64 = arith.constant 0 : index
    %132 = vector.load %arg5[%c0_63, %c0_64] : memref<7x256xf32, #tpu.memory_space<vmem>>, vector<1x256xf32>
    %133 = vector.shape_cast %132 : vector<1x256xf32> to vector<256xf32>
    %134 = vector.shape_cast %133 : vector<256xf32> to vector<1x256xf32>
    %135 = arith.mulf %134, %131 : vector<1x256xf32>
    %c0_65 = arith.constant 0 : index
    %c7 = arith.constant 7 : index
    %136 = memref.load %arg6[%c0_65, %c7] : memref<2x49xf32, #tpu.memory_space<smem>>
    %137 = vector.broadcast %136 : f32 to vector<1x256xf32>
    %138 = arith.mulf %137, %34 : vector<1x256xf32>
    %c1_66 = arith.constant 1 : index
    %c7_67 = arith.constant 7 : index
    %139 = memref.load %arg6[%c1_66, %c7_67] : memref<2x49xf32, #tpu.memory_space<smem>>
    %140 = vector.broadcast %139 : f32 to vector<1x256xf32>
    %141 = arith.mulf %140, %35 : vector<1x256xf32>
    %142 = arith.addf %138, %141 : vector<1x256xf32>
    %c0_68 = arith.constant 0 : index
    %c8 = arith.constant 8 : index
    %143 = memref.load %arg6[%c0_68, %c8] : memref<2x49xf32, #tpu.memory_space<smem>>
    %144 = vector.broadcast %143 : f32 to vector<1x256xf32>
    %145 = arith.mulf %144, %41 : vector<1x256xf32>
    %c1_69 = arith.constant 1 : index
    %c8_70 = arith.constant 8 : index
    %146 = memref.load %arg6[%c1_69, %c8_70] : memref<2x49xf32, #tpu.memory_space<smem>>
    %147 = vector.broadcast %146 : f32 to vector<1x256xf32>
    %148 = arith.mulf %147, %42 : vector<1x256xf32>
    %149 = arith.addf %145, %148 : vector<1x256xf32>
    %150 = arith.addf %142, %149 : vector<1x256xf32>
    %c0_71 = arith.constant 0 : index
    %c9 = arith.constant 9 : index
    %151 = memref.load %arg6[%c0_71, %c9] : memref<2x49xf32, #tpu.memory_space<smem>>
    %152 = vector.broadcast %151 : f32 to vector<1x256xf32>
    %153 = arith.mulf %152, %48 : vector<1x256xf32>
    %c1_72 = arith.constant 1 : index
    %c9_73 = arith.constant 9 : index
    %154 = memref.load %arg6[%c1_72, %c9_73] : memref<2x49xf32, #tpu.memory_space<smem>>
    %155 = vector.broadcast %154 : f32 to vector<1x256xf32>
    %156 = arith.mulf %155, %49 : vector<1x256xf32>
    %157 = arith.addf %153, %156 : vector<1x256xf32>
    %158 = arith.addf %150, %157 : vector<1x256xf32>
    %c0_74 = arith.constant 0 : index
    %c10 = arith.constant 10 : index
    %159 = memref.load %arg6[%c0_74, %c10] : memref<2x49xf32, #tpu.memory_space<smem>>
    %160 = vector.broadcast %159 : f32 to vector<1x256xf32>
    %161 = arith.mulf %160, %53 : vector<1x256xf32>
    %c1_75 = arith.constant 1 : index
    %c10_76 = arith.constant 10 : index
    %162 = memref.load %arg6[%c1_75, %c10_76] : memref<2x49xf32, #tpu.memory_space<smem>>
    %163 = vector.broadcast %162 : f32 to vector<1x256xf32>
    %164 = arith.mulf %163, %54 : vector<1x256xf32>
    %165 = arith.addf %161, %164 : vector<1x256xf32>
    %166 = arith.addf %158, %165 : vector<1x256xf32>
    %c0_77 = arith.constant 0 : index
    %c11 = arith.constant 11 : index
    %167 = memref.load %arg6[%c0_77, %c11] : memref<2x49xf32, #tpu.memory_space<smem>>
    %168 = vector.broadcast %167 : f32 to vector<1x256xf32>
    %169 = arith.mulf %168, %60 : vector<1x256xf32>
    %c1_78 = arith.constant 1 : index
    %c11_79 = arith.constant 11 : index
    %170 = memref.load %arg6[%c1_78, %c11_79] : memref<2x49xf32, #tpu.memory_space<smem>>
    %171 = vector.broadcast %170 : f32 to vector<1x256xf32>
    %172 = arith.mulf %171, %61 : vector<1x256xf32>
    %173 = arith.addf %169, %172 : vector<1x256xf32>
    %174 = arith.addf %166, %173 : vector<1x256xf32>
    %c0_80 = arith.constant 0 : index
    %c12 = arith.constant 12 : index
    %175 = memref.load %arg6[%c0_80, %c12] : memref<2x49xf32, #tpu.memory_space<smem>>
    %176 = vector.broadcast %175 : f32 to vector<1x256xf32>
    %177 = arith.mulf %176, %67 : vector<1x256xf32>
    %c1_81 = arith.constant 1 : index
    %c12_82 = arith.constant 12 : index
    %178 = memref.load %arg6[%c1_81, %c12_82] : memref<2x49xf32, #tpu.memory_space<smem>>
    %179 = vector.broadcast %178 : f32 to vector<1x256xf32>
    %180 = arith.mulf %179, %68 : vector<1x256xf32>
    %181 = arith.addf %177, %180 : vector<1x256xf32>
    %182 = arith.addf %174, %181 : vector<1x256xf32>
    %c0_83 = arith.constant 0 : index
    %c13 = arith.constant 13 : index
    %183 = memref.load %arg6[%c0_83, %c13] : memref<2x49xf32, #tpu.memory_space<smem>>
    %184 = vector.broadcast %183 : f32 to vector<1x256xf32>
    %185 = arith.mulf %184, %74 : vector<1x256xf32>
    %c1_84 = arith.constant 1 : index
    %c13_85 = arith.constant 13 : index
    %186 = memref.load %arg6[%c1_84, %c13_85] : memref<2x49xf32, #tpu.memory_space<smem>>
    %187 = vector.broadcast %186 : f32 to vector<1x256xf32>
    %188 = arith.mulf %187, %75 : vector<1x256xf32>
    %189 = arith.addf %185, %188 : vector<1x256xf32>
    %190 = arith.addf %182, %189 : vector<1x256xf32>
    %c32_i32 = arith.constant 32 : i32
    %191 = tpu.dynamic_rotate %190 by %c32_i32 dim 1 : vector<1x256xf32>, i32 -> vector<1x256xf32>
    %c1_86 = arith.constant 1 : index
    %c0_87 = arith.constant 0 : index
    %192 = vector.load %arg5[%c1_86, %c0_87] : memref<7x256xf32, #tpu.memory_space<vmem>>, vector<1x256xf32>
    %193 = vector.shape_cast %192 : vector<1x256xf32> to vector<256xf32>
    %194 = vector.shape_cast %193 : vector<256xf32> to vector<1x256xf32>
    %195 = arith.mulf %194, %191 : vector<1x256xf32>
    %196 = arith.addf %135, %195 : vector<1x256xf32>
    %c0_88 = arith.constant 0 : index
    %c14 = arith.constant 14 : index
    %197 = memref.load %arg6[%c0_88, %c14] : memref<2x49xf32, #tpu.memory_space<smem>>
    %198 = vector.broadcast %197 : f32 to vector<1x256xf32>
    %199 = arith.mulf %198, %34 : vector<1x256xf32>
    %c1_89 = arith.constant 1 : index
    %c14_90 = arith.constant 14 : index
    %200 = memref.load %arg6[%c1_89, %c14_90] : memref<2x49xf32, #tpu.memory_space<smem>>
    %201 = vector.broadcast %200 : f32 to vector<1x256xf32>
    %202 = arith.mulf %201, %35 : vector<1x256xf32>
    %203 = arith.addf %199, %202 : vector<1x256xf32>
    %c0_91 = arith.constant 0 : index
    %c15 = arith.constant 15 : index
    %204 = memref.load %arg6[%c0_91, %c15] : memref<2x49xf32, #tpu.memory_space<smem>>
    %205 = vector.broadcast %204 : f32 to vector<1x256xf32>
    %206 = arith.mulf %205, %41 : vector<1x256xf32>
    %c1_92 = arith.constant 1 : index
    %c15_93 = arith.constant 15 : index
    %207 = memref.load %arg6[%c1_92, %c15_93] : memref<2x49xf32, #tpu.memory_space<smem>>
    %208 = vector.broadcast %207 : f32 to vector<1x256xf32>
    %209 = arith.mulf %208, %42 : vector<1x256xf32>
    %210 = arith.addf %206, %209 : vector<1x256xf32>
    %211 = arith.addf %203, %210 : vector<1x256xf32>
    %c0_94 = arith.constant 0 : index
    %c16 = arith.constant 16 : index
    %212 = memref.load %arg6[%c0_94, %c16] : memref<2x49xf32, #tpu.memory_space<smem>>
    %213 = vector.broadcast %212 : f32 to vector<1x256xf32>
    %214 = arith.mulf %213, %48 : vector<1x256xf32>
    %c1_95 = arith.constant 1 : index
    %c16_96 = arith.constant 16 : index
    %215 = memref.load %arg6[%c1_95, %c16_96] : memref<2x49xf32, #tpu.memory_space<smem>>
    %216 = vector.broadcast %215 : f32 to vector<1x256xf32>
    %217 = arith.mulf %216, %49 : vector<1x256xf32>
    %218 = arith.addf %214, %217 : vector<1x256xf32>
    %219 = arith.addf %211, %218 : vector<1x256xf32>
    %c0_97 = arith.constant 0 : index
    %c17 = arith.constant 17 : index
    %220 = memref.load %arg6[%c0_97, %c17] : memref<2x49xf32, #tpu.memory_space<smem>>
    %221 = vector.broadcast %220 : f32 to vector<1x256xf32>
    %222 = arith.mulf %221, %53 : vector<1x256xf32>
    %c1_98 = arith.constant 1 : index
    %c17_99 = arith.constant 17 : index
    %223 = memref.load %arg6[%c1_98, %c17_99] : memref<2x49xf32, #tpu.memory_space<smem>>
    %224 = vector.broadcast %223 : f32 to vector<1x256xf32>
    %225 = arith.mulf %224, %54 : vector<1x256xf32>
    %226 = arith.addf %222, %225 : vector<1x256xf32>
    %227 = arith.addf %219, %226 : vector<1x256xf32>
    %c0_100 = arith.constant 0 : index
    %c18 = arith.constant 18 : index
    %228 = memref.load %arg6[%c0_100, %c18] : memref<2x49xf32, #tpu.memory_space<smem>>
    %229 = vector.broadcast %228 : f32 to vector<1x256xf32>
    %230 = arith.mulf %229, %60 : vector<1x256xf32>
    %c1_101 = arith.constant 1 : index
    %c18_102 = arith.constant 18 : index
    %231 = memref.load %arg6[%c1_101, %c18_102] : memref<2x49xf32, #tpu.memory_space<smem>>
    %232 = vector.broadcast %231 : f32 to vector<1x256xf32>
    %233 = arith.mulf %232, %61 : vector<1x256xf32>
    %234 = arith.addf %230, %233 : vector<1x256xf32>
    %235 = arith.addf %227, %234 : vector<1x256xf32>
    %c0_103 = arith.constant 0 : index
    %c19 = arith.constant 19 : index
    %236 = memref.load %arg6[%c0_103, %c19] : memref<2x49xf32, #tpu.memory_space<smem>>
    %237 = vector.broadcast %236 : f32 to vector<1x256xf32>
    %238 = arith.mulf %237, %67 : vector<1x256xf32>
    %c1_104 = arith.constant 1 : index
    %c19_105 = arith.constant 19 : index
    %239 = memref.load %arg6[%c1_104, %c19_105] : memref<2x49xf32, #tpu.memory_space<smem>>
    %240 = vector.broadcast %239 : f32 to vector<1x256xf32>
    %241 = arith.mulf %240, %68 : vector<1x256xf32>
    %242 = arith.addf %238, %241 : vector<1x256xf32>
    %243 = arith.addf %235, %242 : vector<1x256xf32>
    %c0_106 = arith.constant 0 : index
    %c20 = arith.constant 20 : index
    %244 = memref.load %arg6[%c0_106, %c20] : memref<2x49xf32, #tpu.memory_space<smem>>
    %245 = vector.broadcast %244 : f32 to vector<1x256xf32>
    %246 = arith.mulf %245, %74 : vector<1x256xf32>
    %c1_107 = arith.constant 1 : index
    %c20_108 = arith.constant 20 : index
    %247 = memref.load %arg6[%c1_107, %c20_108] : memref<2x49xf32, #tpu.memory_space<smem>>
    %248 = vector.broadcast %247 : f32 to vector<1x256xf32>
    %249 = arith.mulf %248, %75 : vector<1x256xf32>
    %250 = arith.addf %246, %249 : vector<1x256xf32>
    %251 = arith.addf %243, %250 : vector<1x256xf32>
    %c16_i32 = arith.constant 16 : i32
    %252 = tpu.dynamic_rotate %251 by %c16_i32 dim 1 : vector<1x256xf32>, i32 -> vector<1x256xf32>
    %c2_109 = arith.constant 2 : index
    %c0_110 = arith.constant 0 : index
    %253 = vector.load %arg5[%c2_109, %c0_110] : memref<7x256xf32, #tpu.memory_space<vmem>>, vector<1x256xf32>
    %254 = vector.shape_cast %253 : vector<1x256xf32> to vector<256xf32>
    %255 = vector.shape_cast %254 : vector<256xf32> to vector<1x256xf32>
    %256 = arith.mulf %255, %252 : vector<1x256xf32>
    %257 = arith.addf %196, %256 : vector<1x256xf32>
    %c0_111 = arith.constant 0 : index
    %c21 = arith.constant 21 : index
    %258 = memref.load %arg6[%c0_111, %c21] : memref<2x49xf32, #tpu.memory_space<smem>>
    %259 = vector.broadcast %258 : f32 to vector<1x256xf32>
    %260 = arith.mulf %259, %34 : vector<1x256xf32>
    %c1_112 = arith.constant 1 : index
    %c21_113 = arith.constant 21 : index
    %261 = memref.load %arg6[%c1_112, %c21_113] : memref<2x49xf32, #tpu.memory_space<smem>>
    %262 = vector.broadcast %261 : f32 to vector<1x256xf32>
    %263 = arith.mulf %262, %35 : vector<1x256xf32>
    %264 = arith.addf %260, %263 : vector<1x256xf32>
    %c0_114 = arith.constant 0 : index
    %c22 = arith.constant 22 : index
    %265 = memref.load %arg6[%c0_114, %c22] : memref<2x49xf32, #tpu.memory_space<smem>>
    %266 = vector.broadcast %265 : f32 to vector<1x256xf32>
    %267 = arith.mulf %266, %41 : vector<1x256xf32>
    %c1_115 = arith.constant 1 : index
    %c22_116 = arith.constant 22 : index
    %268 = memref.load %arg6[%c1_115, %c22_116] : memref<2x49xf32, #tpu.memory_space<smem>>
    %269 = vector.broadcast %268 : f32 to vector<1x256xf32>
    %270 = arith.mulf %269, %42 : vector<1x256xf32>
    %271 = arith.addf %267, %270 : vector<1x256xf32>
    %272 = arith.addf %264, %271 : vector<1x256xf32>
    %c0_117 = arith.constant 0 : index
    %c23 = arith.constant 23 : index
    %273 = memref.load %arg6[%c0_117, %c23] : memref<2x49xf32, #tpu.memory_space<smem>>
    %274 = vector.broadcast %273 : f32 to vector<1x256xf32>
    %275 = arith.mulf %274, %48 : vector<1x256xf32>
    %c1_118 = arith.constant 1 : index
    %c23_119 = arith.constant 23 : index
    %276 = memref.load %arg6[%c1_118, %c23_119] : memref<2x49xf32, #tpu.memory_space<smem>>
    %277 = vector.broadcast %276 : f32 to vector<1x256xf32>
    %278 = arith.mulf %277, %49 : vector<1x256xf32>
    %279 = arith.addf %275, %278 : vector<1x256xf32>
    %280 = arith.addf %272, %279 : vector<1x256xf32>
    %c0_120 = arith.constant 0 : index
    %c24 = arith.constant 24 : index
    %281 = memref.load %arg6[%c0_120, %c24] : memref<2x49xf32, #tpu.memory_space<smem>>
    %282 = vector.broadcast %281 : f32 to vector<1x256xf32>
    %283 = arith.mulf %282, %53 : vector<1x256xf32>
    %c1_121 = arith.constant 1 : index
    %c24_122 = arith.constant 24 : index
    %284 = memref.load %arg6[%c1_121, %c24_122] : memref<2x49xf32, #tpu.memory_space<smem>>
    %285 = vector.broadcast %284 : f32 to vector<1x256xf32>
    %286 = arith.mulf %285, %54 : vector<1x256xf32>
    %287 = arith.addf %283, %286 : vector<1x256xf32>
    %288 = arith.addf %280, %287 : vector<1x256xf32>
    %c0_123 = arith.constant 0 : index
    %c25 = arith.constant 25 : index
    %289 = memref.load %arg6[%c0_123, %c25] : memref<2x49xf32, #tpu.memory_space<smem>>
    %290 = vector.broadcast %289 : f32 to vector<1x256xf32>
    %291 = arith.mulf %290, %60 : vector<1x256xf32>
    %c1_124 = arith.constant 1 : index
    %c25_125 = arith.constant 25 : index
    %292 = memref.load %arg6[%c1_124, %c25_125] : memref<2x49xf32, #tpu.memory_space<smem>>
    %293 = vector.broadcast %292 : f32 to vector<1x256xf32>
    %294 = arith.mulf %293, %61 : vector<1x256xf32>
    %295 = arith.addf %291, %294 : vector<1x256xf32>
    %296 = arith.addf %288, %295 : vector<1x256xf32>
    %c0_126 = arith.constant 0 : index
    %c26 = arith.constant 26 : index
    %297 = memref.load %arg6[%c0_126, %c26] : memref<2x49xf32, #tpu.memory_space<smem>>
    %298 = vector.broadcast %297 : f32 to vector<1x256xf32>
    %299 = arith.mulf %298, %67 : vector<1x256xf32>
    %c1_127 = arith.constant 1 : index
    %c26_128 = arith.constant 26 : index
    %300 = memref.load %arg6[%c1_127, %c26_128] : memref<2x49xf32, #tpu.memory_space<smem>>
    %301 = vector.broadcast %300 : f32 to vector<1x256xf32>
    %302 = arith.mulf %301, %68 : vector<1x256xf32>
    %303 = arith.addf %299, %302 : vector<1x256xf32>
    %304 = arith.addf %296, %303 : vector<1x256xf32>
    %c0_129 = arith.constant 0 : index
    %c27 = arith.constant 27 : index
    %305 = memref.load %arg6[%c0_129, %c27] : memref<2x49xf32, #tpu.memory_space<smem>>
    %306 = vector.broadcast %305 : f32 to vector<1x256xf32>
    %307 = arith.mulf %306, %74 : vector<1x256xf32>
    %c1_130 = arith.constant 1 : index
    %c27_131 = arith.constant 27 : index
    %308 = memref.load %arg6[%c1_130, %c27_131] : memref<2x49xf32, #tpu.memory_space<smem>>
    %309 = vector.broadcast %308 : f32 to vector<1x256xf32>
    %310 = arith.mulf %309, %75 : vector<1x256xf32>
    %311 = arith.addf %307, %310 : vector<1x256xf32>
    %312 = arith.addf %304, %311 : vector<1x256xf32>
    %c3_132 = arith.constant 3 : index
    %c0_133 = arith.constant 0 : index
    %313 = vector.load %arg5[%c3_132, %c0_133] : memref<7x256xf32, #tpu.memory_space<vmem>>, vector<1x256xf32>
    %314 = vector.shape_cast %313 : vector<1x256xf32> to vector<256xf32>
    %315 = vector.shape_cast %314 : vector<256xf32> to vector<1x256xf32>
    %316 = arith.mulf %315, %312 : vector<1x256xf32>
    %317 = arith.addf %257, %316 : vector<1x256xf32>
    %c0_134 = arith.constant 0 : index
    %c28 = arith.constant 28 : index
    %318 = memref.load %arg6[%c0_134, %c28] : memref<2x49xf32, #tpu.memory_space<smem>>
    %319 = vector.broadcast %318 : f32 to vector<1x256xf32>
    %320 = arith.mulf %319, %34 : vector<1x256xf32>
    %c1_135 = arith.constant 1 : index
    %c28_136 = arith.constant 28 : index
    %321 = memref.load %arg6[%c1_135, %c28_136] : memref<2x49xf32, #tpu.memory_space<smem>>
    %322 = vector.broadcast %321 : f32 to vector<1x256xf32>
    %323 = arith.mulf %322, %35 : vector<1x256xf32>
    %324 = arith.addf %320, %323 : vector<1x256xf32>
    %c0_137 = arith.constant 0 : index
    %c29 = arith.constant 29 : index
    %325 = memref.load %arg6[%c0_137, %c29] : memref<2x49xf32, #tpu.memory_space<smem>>
    %326 = vector.broadcast %325 : f32 to vector<1x256xf32>
    %327 = arith.mulf %326, %41 : vector<1x256xf32>
    %c1_138 = arith.constant 1 : index
    %c29_139 = arith.constant 29 : index
    %328 = memref.load %arg6[%c1_138, %c29_139] : memref<2x49xf32, #tpu.memory_space<smem>>
    %329 = vector.broadcast %328 : f32 to vector<1x256xf32>
    %330 = arith.mulf %329, %42 : vector<1x256xf32>
    %331 = arith.addf %327, %330 : vector<1x256xf32>
    %332 = arith.addf %324, %331 : vector<1x256xf32>
    %c0_140 = arith.constant 0 : index
    %c30 = arith.constant 30 : index
    %333 = memref.load %arg6[%c0_140, %c30] : memref<2x49xf32, #tpu.memory_space<smem>>
    %334 = vector.broadcast %333 : f32 to vector<1x256xf32>
    %335 = arith.mulf %334, %48 : vector<1x256xf32>
    %c1_141 = arith.constant 1 : index
    %c30_142 = arith.constant 30 : index
    %336 = memref.load %arg6[%c1_141, %c30_142] : memref<2x49xf32, #tpu.memory_space<smem>>
    %337 = vector.broadcast %336 : f32 to vector<1x256xf32>
    %338 = arith.mulf %337, %49 : vector<1x256xf32>
    %339 = arith.addf %335, %338 : vector<1x256xf32>
    %340 = arith.addf %332, %339 : vector<1x256xf32>
    %c0_143 = arith.constant 0 : index
    %c31 = arith.constant 31 : index
    %341 = memref.load %arg6[%c0_143, %c31] : memref<2x49xf32, #tpu.memory_space<smem>>
    %342 = vector.broadcast %341 : f32 to vector<1x256xf32>
    %343 = arith.mulf %342, %53 : vector<1x256xf32>
    %c1_144 = arith.constant 1 : index
    %c31_145 = arith.constant 31 : index
    %344 = memref.load %arg6[%c1_144, %c31_145] : memref<2x49xf32, #tpu.memory_space<smem>>
    %345 = vector.broadcast %344 : f32 to vector<1x256xf32>
    %346 = arith.mulf %345, %54 : vector<1x256xf32>
    %347 = arith.addf %343, %346 : vector<1x256xf32>
    %348 = arith.addf %340, %347 : vector<1x256xf32>
    %c0_146 = arith.constant 0 : index
    %c32 = arith.constant 32 : index
    %349 = memref.load %arg6[%c0_146, %c32] : memref<2x49xf32, #tpu.memory_space<smem>>
    %350 = vector.broadcast %349 : f32 to vector<1x256xf32>
    %351 = arith.mulf %350, %60 : vector<1x256xf32>
    %c1_147 = arith.constant 1 : index
    %c32_148 = arith.constant 32 : index
    %352 = memref.load %arg6[%c1_147, %c32_148] : memref<2x49xf32, #tpu.memory_space<smem>>
    %353 = vector.broadcast %352 : f32 to vector<1x256xf32>
    %354 = arith.mulf %353, %61 : vector<1x256xf32>
    %355 = arith.addf %351, %354 : vector<1x256xf32>
    %356 = arith.addf %348, %355 : vector<1x256xf32>
    %c0_149 = arith.constant 0 : index
    %c33 = arith.constant 33 : index
    %357 = memref.load %arg6[%c0_149, %c33] : memref<2x49xf32, #tpu.memory_space<smem>>
    %358 = vector.broadcast %357 : f32 to vector<1x256xf32>
    %359 = arith.mulf %358, %67 : vector<1x256xf32>
    %c1_150 = arith.constant 1 : index
    %c33_151 = arith.constant 33 : index
    %360 = memref.load %arg6[%c1_150, %c33_151] : memref<2x49xf32, #tpu.memory_space<smem>>
    %361 = vector.broadcast %360 : f32 to vector<1x256xf32>
    %362 = arith.mulf %361, %68 : vector<1x256xf32>
    %363 = arith.addf %359, %362 : vector<1x256xf32>
    %364 = arith.addf %356, %363 : vector<1x256xf32>
    %c0_152 = arith.constant 0 : index
    %c34 = arith.constant 34 : index
    %365 = memref.load %arg6[%c0_152, %c34] : memref<2x49xf32, #tpu.memory_space<smem>>
    %366 = vector.broadcast %365 : f32 to vector<1x256xf32>
    %367 = arith.mulf %366, %74 : vector<1x256xf32>
    %c1_153 = arith.constant 1 : index
    %c34_154 = arith.constant 34 : index
    %368 = memref.load %arg6[%c1_153, %c34_154] : memref<2x49xf32, #tpu.memory_space<smem>>
    %369 = vector.broadcast %368 : f32 to vector<1x256xf32>
    %370 = arith.mulf %369, %75 : vector<1x256xf32>
    %371 = arith.addf %367, %370 : vector<1x256xf32>
    %372 = arith.addf %364, %371 : vector<1x256xf32>
    %c240_i32 = arith.constant 240 : i32
    %373 = tpu.dynamic_rotate %372 by %c240_i32 dim 1 : vector<1x256xf32>, i32 -> vector<1x256xf32>
    %c4_155 = arith.constant 4 : index
    %c0_156 = arith.constant 0 : index
    %374 = vector.load %arg5[%c4_155, %c0_156] : memref<7x256xf32, #tpu.memory_space<vmem>>, vector<1x256xf32>
    %375 = vector.shape_cast %374 : vector<1x256xf32> to vector<256xf32>
    %376 = vector.shape_cast %375 : vector<256xf32> to vector<1x256xf32>
    %377 = arith.mulf %376, %373 : vector<1x256xf32>
    %378 = arith.addf %317, %377 : vector<1x256xf32>
    %c0_157 = arith.constant 0 : index
    %c35 = arith.constant 35 : index
    %379 = memref.load %arg6[%c0_157, %c35] : memref<2x49xf32, #tpu.memory_space<smem>>
    %380 = vector.broadcast %379 : f32 to vector<1x256xf32>
    %381 = arith.mulf %380, %34 : vector<1x256xf32>
    %c1_158 = arith.constant 1 : index
    %c35_159 = arith.constant 35 : index
    %382 = memref.load %arg6[%c1_158, %c35_159] : memref<2x49xf32, #tpu.memory_space<smem>>
    %383 = vector.broadcast %382 : f32 to vector<1x256xf32>
    %384 = arith.mulf %383, %35 : vector<1x256xf32>
    %385 = arith.addf %381, %384 : vector<1x256xf32>
    %c0_160 = arith.constant 0 : index
    %c36 = arith.constant 36 : index
    %386 = memref.load %arg6[%c0_160, %c36] : memref<2x49xf32, #tpu.memory_space<smem>>
    %387 = vector.broadcast %386 : f32 to vector<1x256xf32>
    %388 = arith.mulf %387, %41 : vector<1x256xf32>
    %c1_161 = arith.constant 1 : index
    %c36_162 = arith.constant 36 : index
    %389 = memref.load %arg6[%c1_161, %c36_162] : memref<2x49xf32, #tpu.memory_space<smem>>
    %390 = vector.broadcast %389 : f32 to vector<1x256xf32>
    %391 = arith.mulf %390, %42 : vector<1x256xf32>
    %392 = arith.addf %388, %391 : vector<1x256xf32>
    %393 = arith.addf %385, %392 : vector<1x256xf32>
    %c0_163 = arith.constant 0 : index
    %c37 = arith.constant 37 : index
    %394 = memref.load %arg6[%c0_163, %c37] : memref<2x49xf32, #tpu.memory_space<smem>>
    %395 = vector.broadcast %394 : f32 to vector<1x256xf32>
    %396 = arith.mulf %395, %48 : vector<1x256xf32>
    %c1_164 = arith.constant 1 : index
    %c37_165 = arith.constant 37 : index
    %397 = memref.load %arg6[%c1_164, %c37_165] : memref<2x49xf32, #tpu.memory_space<smem>>
    %398 = vector.broadcast %397 : f32 to vector<1x256xf32>
    %399 = arith.mulf %398, %49 : vector<1x256xf32>
    %400 = arith.addf %396, %399 : vector<1x256xf32>
    %401 = arith.addf %393, %400 : vector<1x256xf32>
    %c0_166 = arith.constant 0 : index
    %c38 = arith.constant 38 : index
    %402 = memref.load %arg6[%c0_166, %c38] : memref<2x49xf32, #tpu.memory_space<smem>>
    %403 = vector.broadcast %402 : f32 to vector<1x256xf32>
    %404 = arith.mulf %403, %53 : vector<1x256xf32>
    %c1_167 = arith.constant 1 : index
    %c38_168 = arith.constant 38 : index
    %405 = memref.load %arg6[%c1_167, %c38_168] : memref<2x49xf32, #tpu.memory_space<smem>>
    %406 = vector.broadcast %405 : f32 to vector<1x256xf32>
    %407 = arith.mulf %406, %54 : vector<1x256xf32>
    %408 = arith.addf %404, %407 : vector<1x256xf32>
    %409 = arith.addf %401, %408 : vector<1x256xf32>
    %c0_169 = arith.constant 0 : index
    %c39 = arith.constant 39 : index
    %410 = memref.load %arg6[%c0_169, %c39] : memref<2x49xf32, #tpu.memory_space<smem>>
    %411 = vector.broadcast %410 : f32 to vector<1x256xf32>
    %412 = arith.mulf %411, %60 : vector<1x256xf32>
    %c1_170 = arith.constant 1 : index
    %c39_171 = arith.constant 39 : index
    %413 = memref.load %arg6[%c1_170, %c39_171] : memref<2x49xf32, #tpu.memory_space<smem>>
    %414 = vector.broadcast %413 : f32 to vector<1x256xf32>
    %415 = arith.mulf %414, %61 : vector<1x256xf32>
    %416 = arith.addf %412, %415 : vector<1x256xf32>
    %417 = arith.addf %409, %416 : vector<1x256xf32>
    %c0_172 = arith.constant 0 : index
    %c40 = arith.constant 40 : index
    %418 = memref.load %arg6[%c0_172, %c40] : memref<2x49xf32, #tpu.memory_space<smem>>
    %419 = vector.broadcast %418 : f32 to vector<1x256xf32>
    %420 = arith.mulf %419, %67 : vector<1x256xf32>
    %c1_173 = arith.constant 1 : index
    %c40_174 = arith.constant 40 : index
    %421 = memref.load %arg6[%c1_173, %c40_174] : memref<2x49xf32, #tpu.memory_space<smem>>
    %422 = vector.broadcast %421 : f32 to vector<1x256xf32>
    %423 = arith.mulf %422, %68 : vector<1x256xf32>
    %424 = arith.addf %420, %423 : vector<1x256xf32>
    %425 = arith.addf %417, %424 : vector<1x256xf32>
    %c0_175 = arith.constant 0 : index
    %c41 = arith.constant 41 : index
    %426 = memref.load %arg6[%c0_175, %c41] : memref<2x49xf32, #tpu.memory_space<smem>>
    %427 = vector.broadcast %426 : f32 to vector<1x256xf32>
    %428 = arith.mulf %427, %74 : vector<1x256xf32>
    %c1_176 = arith.constant 1 : index
    %c41_177 = arith.constant 41 : index
    %429 = memref.load %arg6[%c1_176, %c41_177] : memref<2x49xf32, #tpu.memory_space<smem>>
    %430 = vector.broadcast %429 : f32 to vector<1x256xf32>
    %431 = arith.mulf %430, %75 : vector<1x256xf32>
    %432 = arith.addf %428, %431 : vector<1x256xf32>
    %433 = arith.addf %425, %432 : vector<1x256xf32>
    %c224_i32 = arith.constant 224 : i32
    %434 = tpu.dynamic_rotate %433 by %c224_i32 dim 1 : vector<1x256xf32>, i32 -> vector<1x256xf32>
    %c5_178 = arith.constant 5 : index
    %c0_179 = arith.constant 0 : index
    %435 = vector.load %arg5[%c5_178, %c0_179] : memref<7x256xf32, #tpu.memory_space<vmem>>, vector<1x256xf32>
    %436 = vector.shape_cast %435 : vector<1x256xf32> to vector<256xf32>
    %437 = vector.shape_cast %436 : vector<256xf32> to vector<1x256xf32>
    %438 = arith.mulf %437, %434 : vector<1x256xf32>
    %439 = arith.addf %378, %438 : vector<1x256xf32>
    %c0_180 = arith.constant 0 : index
    %c42 = arith.constant 42 : index
    %440 = memref.load %arg6[%c0_180, %c42] : memref<2x49xf32, #tpu.memory_space<smem>>
    %441 = vector.broadcast %440 : f32 to vector<1x256xf32>
    %442 = arith.mulf %441, %34 : vector<1x256xf32>
    %c1_181 = arith.constant 1 : index
    %c42_182 = arith.constant 42 : index
    %443 = memref.load %arg6[%c1_181, %c42_182] : memref<2x49xf32, #tpu.memory_space<smem>>
    %444 = vector.broadcast %443 : f32 to vector<1x256xf32>
    %445 = arith.mulf %444, %35 : vector<1x256xf32>
    %446 = arith.addf %442, %445 : vector<1x256xf32>
    %c0_183 = arith.constant 0 : index
    %c43 = arith.constant 43 : index
    %447 = memref.load %arg6[%c0_183, %c43] : memref<2x49xf32, #tpu.memory_space<smem>>
    %448 = vector.broadcast %447 : f32 to vector<1x256xf32>
    %449 = arith.mulf %448, %41 : vector<1x256xf32>
    %c1_184 = arith.constant 1 : index
    %c43_185 = arith.constant 43 : index
    %450 = memref.load %arg6[%c1_184, %c43_185] : memref<2x49xf32, #tpu.memory_space<smem>>
    %451 = vector.broadcast %450 : f32 to vector<1x256xf32>
    %452 = arith.mulf %451, %42 : vector<1x256xf32>
    %453 = arith.addf %449, %452 : vector<1x256xf32>
    %454 = arith.addf %446, %453 : vector<1x256xf32>
    %c0_186 = arith.constant 0 : index
    %c44 = arith.constant 44 : index
    %455 = memref.load %arg6[%c0_186, %c44] : memref<2x49xf32, #tpu.memory_space<smem>>
    %456 = vector.broadcast %455 : f32 to vector<1x256xf32>
    %457 = arith.mulf %456, %48 : vector<1x256xf32>
    %c1_187 = arith.constant 1 : index
    %c44_188 = arith.constant 44 : index
    %458 = memref.load %arg6[%c1_187, %c44_188] : memref<2x49xf32, #tpu.memory_space<smem>>
    %459 = vector.broadcast %458 : f32 to vector<1x256xf32>
    %460 = arith.mulf %459, %49 : vector<1x256xf32>
    %461 = arith.addf %457, %460 : vector<1x256xf32>
    %462 = arith.addf %454, %461 : vector<1x256xf32>
    %c0_189 = arith.constant 0 : index
    %c45 = arith.constant 45 : index
    %463 = memref.load %arg6[%c0_189, %c45] : memref<2x49xf32, #tpu.memory_space<smem>>
    %464 = vector.broadcast %463 : f32 to vector<1x256xf32>
    %465 = arith.mulf %464, %53 : vector<1x256xf32>
    %c1_190 = arith.constant 1 : index
    %c45_191 = arith.constant 45 : index
    %466 = memref.load %arg6[%c1_190, %c45_191] : memref<2x49xf32, #tpu.memory_space<smem>>
    %467 = vector.broadcast %466 : f32 to vector<1x256xf32>
    %468 = arith.mulf %467, %54 : vector<1x256xf32>
    %469 = arith.addf %465, %468 : vector<1x256xf32>
    %470 = arith.addf %462, %469 : vector<1x256xf32>
    %c0_192 = arith.constant 0 : index
    %c46 = arith.constant 46 : index
    %471 = memref.load %arg6[%c0_192, %c46] : memref<2x49xf32, #tpu.memory_space<smem>>
    %472 = vector.broadcast %471 : f32 to vector<1x256xf32>
    %473 = arith.mulf %472, %60 : vector<1x256xf32>
    %c1_193 = arith.constant 1 : index
    %c46_194 = arith.constant 46 : index
    %474 = memref.load %arg6[%c1_193, %c46_194] : memref<2x49xf32, #tpu.memory_space<smem>>
    %475 = vector.broadcast %474 : f32 to vector<1x256xf32>
    %476 = arith.mulf %475, %61 : vector<1x256xf32>
    %477 = arith.addf %473, %476 : vector<1x256xf32>
    %478 = arith.addf %470, %477 : vector<1x256xf32>
    %c0_195 = arith.constant 0 : index
    %c47 = arith.constant 47 : index
    %479 = memref.load %arg6[%c0_195, %c47] : memref<2x49xf32, #tpu.memory_space<smem>>
    %480 = vector.broadcast %479 : f32 to vector<1x256xf32>
    %481 = arith.mulf %480, %67 : vector<1x256xf32>
    %c1_196 = arith.constant 1 : index
    %c47_197 = arith.constant 47 : index
    %482 = memref.load %arg6[%c1_196, %c47_197] : memref<2x49xf32, #tpu.memory_space<smem>>
    %483 = vector.broadcast %482 : f32 to vector<1x256xf32>
    %484 = arith.mulf %483, %68 : vector<1x256xf32>
    %485 = arith.addf %481, %484 : vector<1x256xf32>
    %486 = arith.addf %478, %485 : vector<1x256xf32>
    %c0_198 = arith.constant 0 : index
    %c48 = arith.constant 48 : index
    %487 = memref.load %arg6[%c0_198, %c48] : memref<2x49xf32, #tpu.memory_space<smem>>
    %488 = vector.broadcast %487 : f32 to vector<1x256xf32>
    %489 = arith.mulf %488, %74 : vector<1x256xf32>
    %c1_199 = arith.constant 1 : index
    %c48_200 = arith.constant 48 : index
    %490 = memref.load %arg6[%c1_199, %c48_200] : memref<2x49xf32, #tpu.memory_space<smem>>
    %491 = vector.broadcast %490 : f32 to vector<1x256xf32>
    %492 = arith.mulf %491, %75 : vector<1x256xf32>
    %493 = arith.addf %489, %492 : vector<1x256xf32>
    %494 = arith.addf %486, %493 : vector<1x256xf32>
    %c208_i32 = arith.constant 208 : i32
    %495 = tpu.dynamic_rotate %494 by %c208_i32 dim 1 : vector<1x256xf32>, i32 -> vector<1x256xf32>
    %c6_201 = arith.constant 6 : index
    %c0_202 = arith.constant 0 : index
    %496 = vector.load %arg5[%c6_201, %c0_202] : memref<7x256xf32, #tpu.memory_space<vmem>>, vector<1x256xf32>
    %497 = vector.shape_cast %496 : vector<1x256xf32> to vector<256xf32>
    %498 = vector.shape_cast %497 : vector<256xf32> to vector<1x256xf32>
    %499 = arith.mulf %498, %495 : vector<1x256xf32>
    %500 = arith.addf %439, %499 : vector<1x256xf32>
    %501 = arith.negf %500 : vector<1x256xf32>
    %502 = math.exp %501 : vector<1x256xf32>
    %cst_203 = arith.constant 1.000000e+00 : f32
    %503 = vector.broadcast %cst_203 : f32 to vector<1x256xf32>
    %504 = arith.addf %503, %502 : vector<1x256xf32>
    %505 = arith.divf %503, %504 : vector<1x256xf32>
    %c0_204 = arith.constant 0 : index
    %c0_205 = arith.constant 0 : index
    %c0_206 = arith.constant 0 : index
    %506 = vector.load %arg7[%c0_204, %c0_205, %c0_206] : memref<1x32x256xf32, #tpu.memory_space<vmem>>, vector<1x32x256xf32>
    %507 = vector.shape_cast %505 : vector<1x256xf32> to vector<1x1x256xf32>
    %508 = vector.broadcast %507 : vector<1x1x256xf32> to vector<1x32x256xf32>
    %509 = arith.mulf %506, %508 : vector<1x32x256xf32>
    %c0_207 = arith.constant 0 : index
    %c0_208 = arith.constant 0 : index
    %c0_209 = arith.constant 0 : index
    %510 = vector.load %arg7[%c0_207, %c0_208, %c0_209] : memref<1x32x256xf32, #tpu.memory_space<vmem>>, vector<1x32x256xf32>
    tpu.vector_store %arg7[%c0_207, %c0_208, %c0_209], %509 {strides = array<i32>} : memref<1x32x256xf32, #tpu.memory_space<vmem>>, vector<1x32x256xf32>,
    return
  }
  func.func @transform_0(%arg0: i32) -> (i32, i32, i32) {
    %c0_i32 = arith.constant 0 : i32
    %c0_i32_0 = arith.constant 0 : i32
    %c0_i32_1 = arith.constant 0 : i32
    return %arg0, %c0_i32, %c0_i32_0 : i32, i32, i32
  }
  func.func @transform_1(%arg0: i32) -> (i32, i32) {
    %c0_i32 = arith.constant 0 : i32
    %c0_i32_0 = arith.constant 0 : i32
    %c0_i32_1 = arith.constant 0 : i32
    return %c0_i32, %c0_i32_0 : i32, i32
  }
  func.func @transform_2(%arg0: i32) -> (i32, i32) {
    %c0_i32 = arith.constant 0 : i32
    %c0_i32_0 = arith.constant 0 : i32
    %c0_i32_1 = arith.constant 0 : i32
    return %c0_i32, %c0_i32_0 : i32, i32
  }
  func.func @transform_3(%arg0: i32) -> (i32, i32) {
    %c0_i32 = arith.constant 0 : i32
    %c0_i32_0 = arith.constant 0 : i32
    %c0_i32_1 = arith.constant 0 : i32
    return %c0_i32, %c0_i32_0 : i32, i32
  }
  func.func @transform_4(%arg0: i32) -> (i32, i32) {
    %c0_i32 = arith.constant 0 : i32
    %c0_i32_0 = arith.constant 0 : i32
    %c0_i32_1 = arith.constant 0 : i32
    return %c0_i32, %c0_i32_0 : i32, i32
  }
  func.func @transform_5(%arg0: i32) -> (i32, i32) {
    %c0_i32 = arith.constant 0 : i32
    %c0_i32_0 = arith.constant 0 : i32
    %c0_i32_1 = arith.constant 0 : i32
    return %c0_i32, %c0_i32_0 : i32, i32
  }
  func.func @transform_6(%arg0: i32) -> (i32, i32, i32) {
    %c0_i32 = arith.constant 0 : i32
    %c0_i32_0 = arith.constant 0 : i32
    %c0_i32_1 = arith.constant 0 : i32
    return %arg0, %c0_i32, %c0_i32_0 : i32, i32, i32
  }
}

</mosaic_0001>

<llo_original>
// kernel: tpu_custom_call.1
$region0: #{tpu_custom_call.1}
  #allocation0 [shape = 'u32[]', space=smem, size = 0x4, offset = 0x4, fixed_abs, tag = 'smem constant byte address 0x4 - core index']
  #allocation1 [shape = 'u32[144,128]{1,0:T(1,128)}', space=vmem, size = 0x12000, scoped, tag = 'internal scratch']
  %s0 = inlined_call_operand.vmem [shape: f32[2,32,256], index: 0, kind: input, shape index: {}]
  %s1 = inlined_call_operand.vmem [shape: f32[32,128], index: 1, kind: input, shape index: {}]
  %s2 = inlined_call_operand.vmem [shape: f32[128,32], index: 2, kind: input, shape index: {}]
  %s3 = inlined_call_operand.hbm [shape: f32[7,256], index: 3, kind: input, shape index: {}]
  %s4 = inlined_call_operand.hbm [shape: f32[7,256], index: 4, kind: input, shape index: {}]
  %s5 = inlined_call_operand.vmem [shape: f32[2,49], index: 5, kind: input, shape index: {}]
  %s6 = inlined_call_operand.hbm [shape: f32[2,32,256], index: 6, kind: output, shape index: {}]
  %s7 = sld [smem:[#allocation0]]
  $region69: #{tpu_custom_call.1} parent=0
    _
  %s9 = ssub.s32 1, %s7
  %s10 = scalar_select 0, %s9, %s7
  $region1: #{tpu_custom_call.1} parent=0
    #allocation2 [shape = 'u8[8192]{0}', space=vmem, size = 0x2000, scoped, tag = 'input window, operand 3, single buffered']
    #allocation3 [shape = 's32[2]{0}', space=sflag, size = 0x8, scoped, tag = 'scoped memory for tpu_custom_call.1']
    #allocation4 [shape = 's32[2]{0}', space=sflag, size = 0x8, scoped, tag = 'scoped memory for tpu_custom_call.1']
    #allocation5 [shape = 's32[2]{0}', space=sflag, size = 0x8, scoped, tag = 'scoped memory for tpu_custom_call.1']
    #allocation6 [shape = 'u8[8192]{0}', space=vmem, size = 0x2000, scoped, tag = 'input window, operand 4, single buffered']
    #allocation7 [shape = 's32[1]{0}', space=sflag, size = 0x4, scoped, tag = 'scoped memory for tpu_custom_call.1']
    #allocation8 [shape = 'u8[1024]{0}', space=smem, size = 0x400, scoped, tag = 'input window, operand 5, single buffered']
    #allocation9 [shape = 'u8[65536]{0}', space=vmem, size = 0x10000, scoped, tag = 'output window, operand 0']
    %11 = vsyncpa [#allocation3], 0
    %12 = vsyncpa [#allocation7], 0
    %13 = vsyncpa [#allocation5], 0
    %14 = vsyncpa [#allocation4], 0
    %s15 = scalar_lea.sflag [#allocation4], 1
    %16 = vsyncpa %s15, 0
    loop: start=0, step=1, limit=4
    $region2: #{tpu_custom_call.1} parent=1 // loop_pre_header
      _
    $region3: #{tpu_custom_call.1} parent=1 // loop_header
      %s18 = sphi 0, %s22
      %p19 = scmp.ge.s32.totalorder %s18, 4
      %s28 = sphi 0, %s30
      %s31 = sphi 0, %s28
      %s32 = sphi 0, %s31
      %s48 = sphi 0, %s32
      %s52 = sphi 0, %s52
      %s54 = sphi 0, %s52
      %s55 = sphi 0, %s54
      %s69 = sphi 0, %s55
      %s73 = sphi 0, %s73
      %s75 = sphi 0, %s73
      %s76 = sphi 0, %s75
      %s90 = sphi 0, %s76
      %s94 = sphi 0, %s94
      %s96 = sphi 0, %s94
      %s97 = sphi 0, %s96
      %s111 = sphi 0, %s97
      %s115 = sphi 0, %s115
      %s117 = sphi 0, %s115
      %s118 = sphi 0, %s117
      %s132 = sphi 0, %s118
      %s136 = sphi 0, %s136
      %s138 = sphi 0, %s136
      %s139 = sphi 0, %s138
      %s153 = sphi 0, %s139
      %s159 = sphi 0, %s161
      %s162 = sphi 0, %s159
      %s163 = sphi 0, %s162
      %s179 = sphi 0, %s163
    $region4: #{tpu_custom_call.1} parent=1 // loop_header_branch
      %21 = sbr.rel (%p19) target = $region8
    $region5: #{tpu_custom_call.1} parent=1 // loop_body
      %s23 = ssub.s32 %s18, 1
      %s24 = ssub.s32 %s18, 2
      %s25 = sadd.s32 %s18, 1
      %s26 = ssub.s32 %s18, %s25
      %p27 = scmp.eq.s32.totalorder %s26, 0
      %s29 = sadd.s32 %s28, 1
      %s30 = scalar_select %p27, %s28, %s29
      %p33 = pneg %p27
      %p34 = scmp.eq.s32.totalorder %s18, 1
      %p35 = por %p33, %p34
      %p36 = scmp.ne.s32.totalorder %s28, %s31
      %p37 = scmp.eq.s32.totalorder %s18, 0
      %p38 = por %p36, %p37
      %p39 = scmp.ne.s32.totalorder %s28, %s31
      %p40 = scmp.eq.s32.totalorder %s23, 1
      %p41 = por %p39, %p40
      %p42 = scmp.ne.s32.totalorder %s31, %s32
      %p43 = scmp.eq.s32.totalorder %s23, 0
      %p44 = por %p42, %p43
      %p45 = scmp.ne.s32.totalorder %s31, %s32
      %p46 = scmp.eq.s32.totalorder %s24, 1
      %p47 = por %p45, %p46
      %p49 = scmp.ne.s32.totalorder %s32, %s48
      %p50 = scmp.eq.s32.totalorder %s24, 0
      %p51 = por %p49, %p50
      %s53 = sadd.s32 %s52, 1
      %p56 = scmp.eq.s32.totalorder %s18, 1
      %p57 = scmp.ne.s32.totalorder %s52, %s54
      %p58 = scmp.eq.s32.totalorder %s18, 0
      %p59 = por %p57, %p58
      %p60 = scmp.ne.s32.totalorder %s52, %s54
      %p61 = scmp.eq.s32.totalorder %s23, 1
      %p62 = por %p60, %p61
      %p63 = scmp.ne.s32.totalorder %s54, %s55
      %p64 = scmp.eq.s32.totalorder %s23, 0
      %p65 = por %p63, %p64
      %p66 = scmp.ne.s32.totalorder %s54, %s55
      %p67 = scmp.eq.s32.totalorder %s24, 1
      %p68 = por %p66, %p67
      %p70 = scmp.ne.s32.totalorder %s55, %s69
      %p71 = scmp.eq.s32.totalorder %s24, 0
      %p72 = por %p70, %p71
      %s74 = sadd.s32 %s73, 1
      %p77 = scmp.eq.s32.totalorder %s18, 1
      %p78 = scmp.ne.s32.totalorder %s73, %s75
      %p79 = scmp.eq.s32.totalorder %s18, 0
      %p80 = por %p78, %p79
      %p81 = scmp.ne.s32.totalorder %s73, %s75
      %p82 = scmp.eq.s32.totalorder %s23, 1
      %p83 = por %p81, %p82
      %p84 = scmp.ne.s32.totalorder %s75, %s76
      %p85 = scmp.eq.s32.totalorder %s23, 0
      %p86 = por %p84, %p85
      %p87 = scmp.ne.s32.totalorder %s75, %s76
      %p88 = scmp.eq.s32.totalorder %s24, 1
      %p89 = por %p87, %p88
      %p91 = scmp.ne.s32.totalorder %s76, %s90
      %p92 = scmp.eq.s32.totalorder %s24, 0
      %p93 = por %p91, %p92
      %s95 = sadd.s32 %s94, 1
      %p98 = scmp.eq.s32.totalorder %s18, 1
      %p99 = scmp.ne.s32.totalorder %s94, %s96
      %p100 = scmp.eq.s32.totalorder %s18, 0
      %p101 = por %p99, %p100
      %p102 = scmp.ne.s32.totalorder %s94, %s96
      %p103 = scmp.eq.s32.totalorder %s23, 1
      %p104 = por %p102, %p103
      %p105 = scmp.ne.s32.totalorder %s96, %s97
      %p106 = scmp.eq.s32.totalorder %s23, 0
      %p107 = por %p105, %p106
      %p108 = scmp.ne.s32.totalorder %s96, %s97
      %p109 = scmp.eq.s32.totalorder %s24, 1
      %p110 = por %p108, %p109
      %p112 = scmp.ne.s32.totalorder %s97, %s111
      %p113 = scmp.eq.s32.totalorder %s24, 0
      %p114 = por %p112, %p113
      %s116 = sadd.s32 %s115, 1
      %p119 = scmp.eq.s32.totalorder %s18, 1
      %p120 = scmp.ne.s32.totalorder %s115, %s117
      %p121 = scmp.eq.s32.totalorder %s18, 0
      %p122 = por %p120, %p121
      %p123 = scmp.ne.s32.totalorder %s115, %s117
      %p124 = scmp.eq.s32.totalorder %s23, 1
      %p125 = por %p123, %p124
      %p126 = scmp.ne.s32.totalorder %s117, %s118
      %p127 = scmp.eq.s32.totalorder %s23, 0
      %p128 = por %p126, %p127
      %p129 = scmp.ne.s32.totalorder %s117, %s118
      %p130 = scmp.eq.s32.totalorder %s24, 1
      %p131 = por %p129, %p130
      %p133 = scmp.ne.s32.totalorder %s118, %s132
      %p134 = scmp.eq.s32.totalorder %s24, 0
      %p135 = por %p133, %p134
      %s137 = sadd.s32 %s136, 1
      %p140 = scmp.eq.s32.totalorder %s18, 1
      %p141 = scmp.ne.s32.totalorder %s136, %s138
      %p142 = scmp.eq.s32.totalorder %s18, 0
      %p143 = por %p141, %p142
      %p144 = scmp.ne.s32.totalorder %s136, %s138
      %p145 = scmp.eq.s32.totalorder %s23, 1
      %p146 = por %p144, %p145
      %p147 = scmp.ne.s32.totalorder %s138, %s139
      %p148 = scmp.eq.s32.totalorder %s23, 0
      %p149 = por %p147, %p148
      %p150 = scmp.ne.s32.totalorder %s138, %s139
      %p151 = scmp.eq.s32.totalorder %s24, 1
      %p152 = por %p150, %p151
      %p154 = scmp.ne.s32.totalorder %s139, %s153
      %p155 = scmp.eq.s32.totalorder %s24, 0
      %p156 = por %p154, %p155
      %s157 = ssub.s32 %s18, %s25
      %p158 = scmp.eq.s32.totalorder %s157, 0
      %s160 = sadd.s32 %s159, 1
      %s161 = scalar_select %p158, %s159, %s160
      %p164 = pneg %p158
      %p165 = scmp.eq.s32.totalorder %s18, 1
      %p166 = por %p164, %p165
      %p167 = scmp.ne.s32.totalorder %s159, %s162
      %p168 = scmp.eq.s32.totalorder %s18, 0
      %p169 = por %p167, %p168
      %p170 = scmp.ne.s32.totalorder %s159, %s162
      %p171 = scmp.eq.s32.totalorder %s23, 1
      %p172 = por %p170, %p171
      %p173 = scmp.ne.s32.totalorder %s162, %s163
      %p174 = scmp.eq.s32.totalorder %s23, 0
      %p175 = por %p173, %p174
      %p176 = scmp.ne.s32.totalorder %s162, %s163
      %p177 = scmp.eq.s32.totalorder %s24, 1
      %p178 = por %p176, %p177
      %p180 = scmp.ne.s32.totalorder %s163, %s179
      %p181 = scmp.eq.s32.totalorder %s24, 0
      %p182 = por %p180, %p181
      %p183 = scmp.le.s32.totalorder 1, %s18
      %p184 = scmp.lt.s32.totalorder %s18, 3
      %p185 = pnand %p183, %p184
      %p186 = pneg %p185
      // Predicated region
      $region9: #{tpu_custom_call.1} parent=5 // pred_check
        _
      $region10: #{tpu_custom_call.1} parent=5 // pred_check_branch
        %188 = sbr.rel (%p185) target = $region12
      $region11: #{tpu_custom_call.1} parent=5 // pred_region
        %s189 = ssub.s32 %s18, 1
        // Predicated region
        $region13: #{tpu_custom_call.1} parent=11 // pred_check
          %p190 = pneg %p65
        $region14: #{tpu_custom_call.1} parent=11 // pred_check_branch
          %192 = sbr.rel (%p190) target = $region16
        $region15: #{tpu_custom_call.1} parent=11 // pred_region
          _
        $region16: #{tpu_custom_call.1} parent=11 // pred_fallthru
          _
        // Predicated region
        $region17: #{tpu_custom_call.1} parent=11 // pred_check
          %p193 = pneg %p86
        $region18: #{tpu_custom_call.1} parent=11 // pred_check_branch
          %195 = sbr.rel (%p193) target = $region20
        $region19: #{tpu_custom_call.1} parent=11 // pred_region
          _
        $region20: #{tpu_custom_call.1} parent=11 // pred_fallthru
          _
        // Predicated region
        $region21: #{tpu_custom_call.1} parent=11 // pred_check
          %p196 = pneg %p107
        $region22: #{tpu_custom_call.1} parent=11 // pred_check_branch
          %198 = sbr.rel (%p196) target = $region24
        $region23: #{tpu_custom_call.1} parent=11 // pred_region
          %s200 = ssub.s32 256, 256
          %201 = vsyncadd [#allocation3], %s200
          %s203 = sshll.u32 [#allocation2], 4
          %s204 = int_to_ptr.vmem [resolvable:$true] %s203
          %206 = dma.hbm_to_vmem [thread:$0]  %s3, 256, %s204, [#allocation3]
        $region24: #{tpu_custom_call.1} parent=11 // pred_fallthru
          _
        // Predicated region
        $region25: #{tpu_custom_call.1} parent=11 // pred_check
          %p207 = pneg %p128
        $region26: #{tpu_custom_call.1} parent=11 // pred_check_branch
          %209 = sbr.rel (%p207) target = $region28
        $region27: #{tpu_custom_call.1} parent=11 // pred_region
          %s211 = ssub.s32 256, 256
          %212 = vsyncadd [#allocation7], %s211
          %s214 = sshll.u32 [#allocation6], 4
          %s215 = int_to_ptr.vmem [resolvable:$true] %s214
          %217 = dma.hbm_to_vmem [thread:$0]  %s4, 256, %s215, [#allocation7]
        $region28: #{tpu_custom_call.1} parent=11 // pred_fallthru
          _
        // Predicated region
        $region29: #{tpu_custom_call.1} parent=11 // pred_check
          %p218 = pneg %p149
        $region30: #{tpu_custom_call.1} parent=11 // pred_check_branch
          %220 = sbr.rel (%p218) target = $region32
        $region31: #{tpu_custom_call.1} parent=11 // pred_region
          %s222 = ssub.s32 32, 32
          %223 = vsyncadd [#allocation5], %s222
          %s225 = sshll.u32 %s5, 4
          %s226 = int_to_ptr.vmem [resolvable:$true] %s225
          %228 = dma.vmem_to_smem %s226, 32, [#allocation8], [#allocation5]
        $region32: #{tpu_custom_call.1} parent=11 // pred_fallthru
          _
      $region12: #{tpu_custom_call.1} parent=5 // pred_fallthru
        _
      %p229 = scmp.lt.s32.totalorder %s18, 2
      // Predicated region
      $region33: #{tpu_custom_call.1} parent=5 // pred_check
        %p230 = pneg %p229
      $region34: #{tpu_custom_call.1} parent=5 // pred_check_branch
        %232 = sbr.rel (%p230) target = $region36
      $region35: #{tpu_custom_call.1} parent=5 // pred_region
        // Predicated region
        $region37: #{tpu_custom_call.1} parent=35 // pred_check
          %p233 = pneg %p38
        $region38: #{tpu_custom_call.1} parent=35 // pred_check_branch
          %235 = sbr.rel (%p233) target = $region40
        $region39: #{tpu_custom_call.1} parent=35 // pred_region
          %p236 = scmp.lt.s32.totalorder %s18, 1
          %s237 = scalar_select %p236, %s18, 1
          %s238 = smul.addr %s237, 8
          %s239 = smul.addr %s238, 8
          %s240 = scalar_lea.vmem %s0, %s239
        $region40: #{tpu_custom_call.1} parent=35 // pred_fallthru
          _
      $region36: #{tpu_custom_call.1} parent=5 // pred_fallthru
        _
      %p241 = scmp.le.s32.totalorder 1, %s18
      %p242 = scmp.lt.s32.totalorder %s18, 3
      %p243 = pnand %p241, %p242
      %p244 = pneg %p243
      // Predicated region
      $region41: #{tpu_custom_call.1} parent=5 // pred_check
        _
      $region42: #{tpu_custom_call.1} parent=5 // pred_check_branch
        %246 = sbr.rel (%p243) target = $region44
      $region43: #{tpu_custom_call.1} parent=5 // pred_region
        %s247 = ssub.s32 %s18, 1
        // Predicated region
        $region45: #{tpu_custom_call.1} parent=43 // pred_check
          %p248 = pneg %p107
        $region46: #{tpu_custom_call.1} parent=43 // pred_check_branch
          %250 = sbr.rel (%p248) target = $region48
        $region47: #{tpu_custom_call.1} parent=43 // pred_region
          %251 = dma.done [#allocation3], 256
        $region48: #{tpu_custom_call.1} parent=43 // pred_fallthru
          _
        // Predicated region
        $region49: #{tpu_custom_call.1} parent=43 // pred_check
          %p252 = pneg %p128
        $region50: #{tpu_custom_call.1} parent=43 // pred_check_branch
          %254 = sbr.rel (%p252) target = $region52
        $region51: #{tpu_custom_call.1} parent=43 // pred_region
          %255 = dma.done [#allocation7], 256
        $region52: #{tpu_custom_call.1} parent=43 // pred_fallthru
          _
        // Predicated region
        $region53: #{tpu_custom_call.1} parent=43 // pred_check
          %p256 = pneg %p149
        $region54: #{tpu_custom_call.1} parent=43 // pred_check_branch
          %258 = sbr.rel (%p256) target = $region56
        $region55: #{tpu_custom_call.1} parent=43 // pred_region
          %259 = dma.done [#allocation5], 32
        $region56: #{tpu_custom_call.1} parent=43 // pred_fallthru
          _
        %260 = sfence
        %p261 = scmp.lt.s32.totalorder %s23, 1
        %s262 = scalar_select %p261, %s23, 1
        %s263 = smul.addr %s262, 8
        %s264 = smul.addr %s263, 8
        %s265 = scalar_lea.vmem %s0, %s264
        %p266 = pneg %p44
        %p267 = pneg %p41
        %p268 = pneg %p65
        %p269 = pneg %p62
        %p270 = pneg %p86
        %p271 = pneg %p83
        %p272 = pneg %p107
        %p273 = pneg %p104
        %p274 = pneg %p128
        %p275 = pneg %p125
        %p276 = pneg %p149
        %p277 = pneg %p146
        %p278 = pneg %p175
        %p279 = pneg %p172
        %s280 = sand.u32 %s162, 1
        %s281 = scalar_lea.sflag [#allocation4], %s280
        %s282 = sand.u32 %s162, 1
        %s283 = smul.addr %s282, 64
        %s284 = scalar_lea.vmem [#allocation9], %s283
        %p285 = scmp.lt.s32.totalorder %s23, 1
        %s286 = scalar_select %p285, %s23, 1
        %s287 = smul.addr %s286, 8
        %s288 = smul.addr %s287, 8
        %s289 = scalar_lea.vmem %s0, %s288
        %v290 = vld [vmem:[%s289] sm:$0xff]
        %v291 = vld [vmem:[%s289 + $0x8] sm:$0xff]
        %v292 = vld [vmem:[%s289 + $0x10] sm:$0xff]
        %v293 = vld [vmem:[%s289 + $0x18] sm:$0xff]
        %v294 = vld [vmem:[%s289 + $0x20] sm:$0xff]
        %v295 = vld [vmem:[%s289 + $0x28] sm:$0xff]
        %v296 = vld [vmem:[%s289 + $0x30] sm:$0xff]
        %v297 = vld [vmem:[%s289 + $0x38] sm:$0xff]
        %v298 = vmax.f32 %v290, %v291
        %299 = vmax.xlane.f32.xlu0 %v298
        %v300 = vpop.xlane.xlu0 %299
        %v301 = vmax.f32 %v292, %v293
        %302 = vmax.xlane.f32.xlu0 %v301
        %v303 = vpop.xlane.xlu0 %302
        %v304 = vmax.f32 %v294, %v295
        %305 = vmax.xlane.f32.xlu0 %v304
        %v306 = vpop.xlane.xlu0 %305
        %v307 = vmax.f32 %v296, %v297
        %308 = vmax.xlane.f32.xlu0 %v307
        %v309 = vpop.xlane.xlu0 %308
        %v310 = vadd.f32 %v290, %v291
        %311 = vadd.xlane.f32.xlu0 %v310
        %v312 = vpop.xlane.xlu0 %311
        %v313 = vadd.f32 %v292, %v293
        %314 = vadd.xlane.f32.xlu0 %v313
        %v315 = vpop.xlane.xlu0 %314
        %v316 = vadd.f32 %v294, %v295
        %317 = vadd.xlane.f32.xlu0 %v316
        %v318 = vpop.xlane.xlu0 %317
        %v319 = vadd.f32 %v296, %v297
        %320 = vadd.xlane.f32.xlu0 %v319
        %v321 = vpop.xlane.xlu0 %320
        %v322 = vmul.f32 %v312, 0.00390625
        %v323 = vmul.f32 %v315, 0.00390625
        %v324 = vmul.f32 %v318, 0.00390625
        %v325 = vmul.f32 %v321, 0.00390625
        %v330 = vlaneseq
        %v331 = vand.u32 %v330, 127
        %v332 = vlaneseq
        %v333 = vshrl.u32 %v332, 7
        %v334 = vsub.s32 %v331, %v333
        %v335 = vrot.slane %v300, %v334
        %v336 = vadd.s32 %v331, 4294967288
        %v337 = vlaneseq
        %v338 = vshrl.u32 %v337, 7
        %v339 = vsub.s32 %v336, %v338
        %v340 = vrot.slane %v303, %v339
        %vm341 = vcmask 130112
        %v342 = vsel %vm341, %v340, %v335
        %v343 = vadd.s32 %v331, 4294967280
        %v344 = vlaneseq
        %v345 = vshrl.u32 %v344, 7
        %v346 = vsub.s32 %v343, %v345
        %v347 = vrot.slane %v306, %v346
        %vm348 = vcmask 195712
        %v349 = vsel %vm348, %v347, %v342
        %v350 = vadd.s32 %v331, 4294967272
        %v351 = vlaneseq
        %v352 = vshrl.u32 %v351, 7
        %v353 = vsub.s32 %v350, %v352
        %v354 = vrot.slane %v309, %v353
        %vm355 = vcmask 261312
        %v356 = vsel %vm355, %v354, %v349
        %v362 = vlaneseq
        %v363 = vshrl.u32 %v362, 7
        %v364 = vsub.s32 %v331, %v363
        %v365 = vrot.slane %v322, %v364
        %v366 = vlaneseq
        %v367 = vshrl.u32 %v366, 7
        %v368 = vsub.s32 %v336, %v367
        %v369 = vrot.slane %v323, %v368
        %v370 = vsel %vm341, %v369, %v365
        %v371 = vlaneseq
        %v372 = vshrl.u32 %v371, 7
        %v373 = vsub.s32 %v343, %v372
        %v374 = vrot.slane %v324, %v373
        %v375 = vsel %vm348, %v374, %v370
        %v376 = vlaneseq
        %v377 = vshrl.u32 %v376, 7
        %v378 = vsub.s32 %v350, %v377
        %v379 = vrot.slane %v325, %v378
        %v380 = vsel %vm355, %v379, %v375
        %vm382 = vcmask 1040384
        %v383 = vsel %vm382, %v356, %v380
        %v384 = vld [vmem:[%s1] sm:$0xff]
        %v385 = vld [vmem:[%s1 + $0x8] sm:$0xff]
        %v386 = vld [vmem:[%s1 + $0x10] sm:$0xff]
        %v387 = vld [vmem:[%s1 + $0x18] sm:$0xff]
        %vm388 = vcmask 261120
        %v390 = vsel %vm388, %v383, 0
        %392 = vmatprep.subr.mxu0 0.0
        %393 = vmatpush1.msra.mxu0 %v384
        %394 = vmatprep.subr.mxu0 0.0
        %395 = vmatpush1.msra.mxu0 %v385
        %396 = vmatprep.subr.mxu0 0.0
        %397 = vmatpush1.msra.mxu0 %v386
        %398 = vmatprep.subr.mxu0 0.0
        %399 = vmatpush1.msra.mxu0 %v387
        %400 = vmatprep.subr.mxu0 0.0
        %401 = vmatpush1.msra.mxu0 0.0
        %402 = vmatprep.subr.mxu0 0.0
        %403 = vmatpush1.msra.mxu0 0.0
        %404 = vmatprep.subr.mxu0 0.0
        %405 = vmatpush1.msra.mxu0 0.0
        %406 = vmatprep.subr.mxu0 0.0
        %407 = vmatpush1.msra.mxu0 0.0
        %408 = vmatprep.subr.mxu0 0.0
        %409 = vmatpush1.msra.mxu0 0.0
        %410 = vmatprep.subr.mxu0 0.0
        %411 = vmatpush1.msra.mxu0 0.0
        %412 = vmatprep.subr.mxu0 0.0
        %413 = vmatpush1.msra.mxu0 0.0
        %414 = vmatprep.subr.mxu0 0.0
        %415 = vmatpush1.msra.mxu0 0.0
        %416 = vmatprep.subr.mxu0 0.0
        %417 = vmatpush1.msra.mxu0 0.0
        %418 = vmatprep.subr.mxu0 0.0
        %419 = vmatpush1.msra.mxu0 0.0
        %420 = vmatprep.subr.mxu0 0.0
        %421 = vmatpush1.msra.mxu0 0.0
        %422 = vmatprep.subr.mxu0 0.0
        %423 = vmatpush1.msra.mxu0 0.0
        %424 = vmatprep.subr.mxu0 0.0
        %425 = vmatpush1.msra.mxu0 0.0
        %426 = vmatprep.subr.mxu0 0.0
        %427 = vmatpush1.msra.mxu0 0.0
        %428 = vmatprep.subr.mxu0 0.0
        %429 = vmatpush1.msra.mxu0 0.0
        %430 = vmatprep.subr.mxu0 0.0
        %431 = vmatpush1.msra.mxu0 0.0
        %432 = vmatprep.subr.mxu0 0.0
        %433 = vmatpush1.msra.mxu0 0.0
        %434 = vmatprep.subr.mxu0 0.0
        %435 = vmatpush1.msra.mxu0 0.0
        %436 = vmatprep.subr.mxu0 0.0
        %437 = vmatpush1.msra.mxu0 0.0
        %438 = vmatprep.subr.mxu0 0.0
        %439 = vmatpush1.msra.mxu0 0.0
        %440 = vmatprep.subr.mxu0 0.0
        %441 = vmatpush1.msra.mxu0 0.0
        %442 = vmatprep.subr.mxu0 0.0
        %443 = vmatpush1.msra.mxu0 0.0
        %444 = vmatprep.subr.mxu0 0.0
        %445 = vmatpush1.msra.mxu0 0.0
        %446 = vmatprep.subr.mxu0 0.0
        %447 = vmatpush1.msra.mxu0 0.0
        %448 = vmatprep.subr.mxu0 0.0
        %449 = vmatpush1.msra.mxu0 0.0
        %450 = vmatprep.subr.mxu0 0.0
        %451 = vmatpush1.msra.mxu0 0.0
        %452 = vmatprep.subr.mxu0 0.0
        %453 = vmatpush1.msra.mxu0 0.0
        %454 = vmatprep.subr.mxu0 0.0
        %455 = vmatpush1.msra.mxu0 0.0
        %456 = vmatprep.mubr.f32.mxu0 0.0
        %457 = vmatmul.mubr.f32.gmra.mrb[0].mxu0 %v390
        %v458 = vpop.f32.mrb[0].mxu0
        %v459 = vadd.f32 0.0, %v458
        %v460 = vpop.f32.mrb[0].mxu0
        %461 = vdwg.mxu0
        %v462 = vmax.f32 %v459, 0.0
        %v463 = vld [vmem:[%s2] sm:$0xff]
        %v464 = vld [vmem:[%s2 + $0x8] sm:$0xff]
        %v465 = vld [vmem:[%s2 + $0x10] sm:$0xff]
        %v466 = vld [vmem:[%s2 + $0x18] sm:$0xff]
        %v467 = vld [vmem:[%s2 + $0x20] sm:$0xff]
        %v468 = vld [vmem:[%s2 + $0x28] sm:$0xff]
        %v469 = vld [vmem:[%s2 + $0x30] sm:$0xff]
        %v470 = vld [vmem:[%s2 + $0x38] sm:$0xff]
        %v471 = vld [vmem:[%s2 + $0x40] sm:$0xff]
        %v472 = vld [vmem:[%s2 + $0x48] sm:$0xff]
        %v473 = vld [vmem:[%s2 + $0x50] sm:$0xff]
        %v474 = vld [vmem:[%s2 + $0x58] sm:$0xff]
        %v475 = vld [vmem:[%s2 + $0x60] sm:$0xff]
        %v476 = vld [vmem:[%s2 + $0x68] sm:$0xff]
        %v477 = vld [vmem:[%s2 + $0x70] sm:$0xff]
        %v478 = vld [vmem:[%s2 + $0x78] sm:$0xff]
        %479 = vmatprep.subr.mxu0 0.0
        %480 = vmatpush1.msra.mxu0 %v463
        %481 = vmatprep.subr.mxu0 0.0
        %482 = vmatpush1.msra.mxu0 %v464
        %483 = vmatprep.subr.mxu0 0.0
        %484 = vmatpush1.msra.mxu0 %v465
        %485 = vmatprep.subr.mxu0 0.0
        %486 = vmatpush1.msra.mxu0 %v466
        %487 = vmatprep.subr.mxu0 0.0
        %488 = vmatpush1.msra.mxu0 %v467
        %489 = vmatprep.subr.mxu0 0.0
        %490 = vmatpush1.msra.mxu0 %v468
        %491 = vmatprep.subr.mxu0 0.0
        %492 = vmatpush1.msra.mxu0 %v469
        %493 = vmatprep.subr.mxu0 0.0
        %494 = vmatpush1.msra.mxu0 %v470
        %495 = vmatprep.subr.mxu0 0.0
        %496 = vmatpush1.msra.mxu0 %v471
        %497 = vmatprep.subr.mxu0 0.0
        %498 = vmatpush1.msra.mxu0 %v472
        %499 = vmatprep.subr.mxu0 0.0
        %500 = vmatpush1.msra.mxu0 %v473
        %501 = vmatprep.subr.mxu0 0.0
        %502 = vmatpush1.msra.mxu0 %v474
        %503 = vmatprep.subr.mxu0 0.0
        %504 = vmatpush1.msra.mxu0 %v475
        %505 = vmatprep.subr.mxu0 0.0
        %506 = vmatpush1.msra.mxu0 %v476
        %507 = vmatprep.subr.mxu0 0.0
        %508 = vmatpush1.msra.mxu0 %v477
        %509 = vmatprep.subr.mxu0 0.0
        %510 = vmatpush1.msra.mxu0 %v478
        %511 = vmatprep.subr.mxu0 0.0
        %512 = vmatpush1.msra.mxu0 0.0
        %513 = vmatprep.subr.mxu0 0.0
        %514 = vmatpush1.msra.mxu0 0.0
        %515 = vmatprep.subr.mxu0 0.0
        %516 = vmatpush1.msra.mxu0 0.0
        %517 = vmatprep.subr.mxu0 0.0
        %518 = vmatpush1.msra.mxu0 0.0
        %519 = vmatprep.subr.mxu0 0.0
        %520 = vmatpush1.msra.mxu0 0.0
        %521 = vmatprep.subr.mxu0 0.0
        %522 = vmatpush1.msra.mxu0 0.0
        %523 = vmatprep.subr.mxu0 0.0
        %524 = vmatpush1.msra.mxu0 0.0
        %525 = vmatprep.subr.mxu0 0.0
        %526 = vmatpush1.msra.mxu0 0.0
        %527 = vmatprep.subr.mxu0 0.0
        %528 = vmatpush1.msra.mxu0 0.0
        %529 = vmatprep.subr.mxu0 0.0
        %530 = vmatpush1.msra.mxu0 0.0
        %531 = vmatprep.subr.mxu0 0.0
        %532 = vmatpush1.msra.mxu0 0.0
        %533 = vmatprep.subr.mxu0 0.0
        %534 = vmatpush1.msra.mxu0 0.0
        %535 = vmatprep.subr.mxu0 0.0
        %536 = vmatpush1.msra.mxu0 0.0
        %537 = vmatprep.subr.mxu0 0.0
        %538 = vmatpush1.msra.mxu0 0.0
        %539 = vmatprep.subr.mxu0 0.0
        %540 = vmatpush1.msra.mxu0 0.0
        %541 = vmatprep.subr.mxu0 0.0
        %542 = vmatpush1.msra.mxu0 0.0
        %543 = vmatprep.mubr.f32.mxu0 0.0
        %544 = vmatmul.mubr.f32.gmra.mrb[0].mxu0 %v462
        %v545 = vpop.f32.mrb[0].mxu0
        %v546 = vadd.f32 0.0, %v545
        %v547 = vpop.f32.mrb[0].mxu0
        %548 = vdwg.mxu0
        %v550 = vrot.slane %v546, 1
        %v552 = vadd.f32 %v546, %v550
        %v553 = vxor.u32 %v552, 2147483648
        %v554 = vmul.f32 %v553, 1.442695
        %v555 = vpow.pop %v554
        %v556 = vadd.f32 %v555, 1.0
        %v557 = vrcp.pop %v556
        %v558 = vmul.f32 1.0, %v557
        %v559 = vlaneseq
        %v560 = vshrl.u32 %v559, 7
        %v561 = vsub.s32 0, %v560
        %v562 = vrot.slane %v558, %v561
        %564 = vbcast.lane.b32.xlu0 %v562, 256
        %v565 = vpop.permute.xlu0 %564
        %s567 = sor.u32 256, 8
        %568 = vbcast.lane.b32.xlu0 %v562, %s567
        %v569 = vpop.permute.xlu0 %568
        %s571 = sor.u32 256, 16
        %572 = vbcast.lane.b32.xlu0 %v562, %s571
        %v573 = vpop.permute.xlu0 %572
        %s575 = sor.u32 256, 24
        %576 = vbcast.lane.b32.xlu0 %v562, %s575
        %v577 = vpop.permute.xlu0 %576
        %v578 = vmul.f32 %v290, %v565
        %v579 = vmul.f32 %v291, %v565
        %v580 = vmul.f32 %v292, %v569
        %v581 = vmul.f32 %v293, %v569
        %v582 = vmul.f32 %v294, %v573
        %v583 = vmul.f32 %v295, %v573
        %v584 = vmul.f32 %v296, %v577
        %v585 = vmul.f32 %v297, %v577
        %586 = vst [vmem:[%s284] sm:$0xff] %v578
        %587 = vst [vmem:[%s284 + $0x8] sm:$0xff] %v579
        %588 = vst [vmem:[%s284 + $0x10] sm:$0xff] %v580
        %589 = vst [vmem:[%s284 + $0x18] sm:$0xff] %v581
        %590 = vst [vmem:[%s284 + $0x20] sm:$0xff] %v582
        %591 = vst [vmem:[%s284 + $0x28] sm:$0xff] %v583
        %592 = vst [vmem:[%s284 + $0x30] sm:$0xff] %v584
        %593 = vst [vmem:[%s284 + $0x38] sm:$0xff] %v585
        %v594 = vld [vmem:[%s284] sm:$0xff]
        %v595 = vld [vmem:[%s284 + $0x8] sm:$0xff]
        %v596 = vld [vmem:[%s284 + $0x10] sm:$0xff]
        %v597 = vld [vmem:[%s284 + $0x18] sm:$0xff]
        %v598 = vld [vmem:[%s284 + $0x20] sm:$0xff]
        %v599 = vld [vmem:[%s284 + $0x28] sm:$0xff]
        %v600 = vld [vmem:[%s284 + $0x30] sm:$0xff]
        %v601 = vld [vmem:[%s284 + $0x38] sm:$0xff]
        %v602 = vmax.f32 %v594, %v598
        %v603 = vmax.f32 %v596, %v600
        %v604 = vmax.f32 %v602, %v603
        %v605 = vrot.slane %v604, 4
        %v606 = vmax.f32 %v604, %v605
        %v607 = vrot.slane %v606, 2
        %v608 = vmax.f32 %v606, %v607
        %v609 = vrot.slane %v608, 1
        %v610 = vmax.f32 %v608, %v609
        %v611 = vmax.f32 %v595, %v599
        %v612 = vmax.f32 %v597, %v601
        %v613 = vmax.f32 %v611, %v612
        %v614 = vrot.slane %v613, 4
        %v615 = vmax.f32 %v613, %v614
        %v616 = vrot.slane %v615, 2
        %v617 = vmax.f32 %v615, %v616
        %v618 = vrot.slane %v617, 1
        %v619 = vmax.f32 %v617, %v618
        %v620 = vadd.f32 %v594, %v596
        %v621 = vadd.f32 %v620, %v598
        %v622 = vadd.f32 %v621, %v600
        %v623 = vrot.slane %v622, 4
        %v624 = vadd.f32 %v622, %v623
        %v625 = vrot.slane %v624, 2
        %v626 = vadd.f32 %v624, %v625
        %v627 = vrot.slane %v626, 1
        %v628 = vadd.f32 %v626, %v627
        %v629 = vadd.f32 %v595, %v597
        %v630 = vadd.f32 %v629, %v599
        %v631 = vadd.f32 %v630, %v601
        %v632 = vrot.slane %v631, 4
        %v633 = vadd.f32 %v631, %v632
        %v634 = vrot.slane %v633, 2
        %v635 = vadd.f32 %v633, %v634
        %v636 = vrot.slane %v635, 1
        %v637 = vadd.f32 %v635, %v636
        %v638 = vmul.f32 %v628, 0.03125
        %v639 = vmul.f32 %v637, 0.03125
        %640 = vrot.lane.b32.xlu0 %v610, 3
        %v641 = vpop.permute.xlu0 %640
        %642 = vrot.lane.b32.xlu0 %v619, 3
        %v643 = vpop.permute.xlu0 %642
        %vm644 = vcmp.lt.s32.totalorder %v331, 3
        %v645 = vsel %vm644, %v641, %v643
        %v646 = vsel %vm644, %v643, %v641
        %647 = vrot.lane.b32.xlu0 %v638, 3
        %v648 = vpop.permute.xlu0 %647
        %649 = vrot.lane.b32.xlu0 %v639, 3
        %v650 = vpop.permute.xlu0 %649
        %v651 = vsel %vm644, %v648, %v650
        %v652 = vsel %vm644, %v650, %v648
        %v653 = vld [vmem:[#allocation2] ss:$8 sm:$0x3]
        %v655 = vlaneseq
        %v656 = vshrl.u32 %v655, 7
        %v657 = vsub.s32 0, %v656
        %v658 = vrot.slane %v653, %v657
        %v659 = vlaneseq
        %v660 = vshrl.u32 %v659, 7
        %v661 = vsub.s32 1, %v660
        %v662 = vrot.slane %v653, %v661
        %v665 = vmul.f32 %v646, %v658
        %v666 = vmul.f32 %v645, %v662
        %v667 = vmul.f32 %v652, %v658
        %v668 = vmul.f32 %v651, %v662
        %669 = vrot.lane.b32.xlu0 %v610, 2
        %v670 = vpop.permute.xlu0 %669
        %671 = vrot.lane.b32.xlu0 %v619, 2
        %v672 = vpop.permute.xlu0 %671
        %vm673 = vcmp.lt.s32.totalorder %v331, 2
        %v674 = vsel %vm673, %v670, %v672
        %v675 = vsel %vm673, %v672, %v670
        %676 = vrot.lane.b32.xlu0 %v638, 2
        %v677 = vpop.permute.xlu0 %676
        %678 = vrot.lane.b32.xlu0 %v639, 2
        %v679 = vpop.permute.xlu0 %678
        %v680 = vsel %vm673, %v677, %v679
        %v681 = vsel %vm673, %v679, %v677
        %s682 = scalar_lea.vmem [#allocation2], 1
        %v683 = vld [vmem:[%s682] ss:$8 sm:$0x3]
        %v685 = vlaneseq
        %v686 = vshrl.u32 %v685, 7
        %v687 = vsub.s32 0, %v686
        %v688 = vrot.slane %v683, %v687
        %v689 = vlaneseq
        %v690 = vshrl.u32 %v689, 7
        %v691 = vsub.s32 1, %v690
        %v692 = vrot.slane %v683, %v691
        %v695 = vmul.f32 %v675, %v688
        %v696 = vmul.f32 %v674, %v692
        %v697 = vmul.f32 %v681, %v688
        %v698 = vmul.f32 %v680, %v692
        %699 = vrot.lane.b32.xlu0 %v610, 1
        %v700 = vpop.permute.xlu0 %699
        %701 = vrot.lane.b32.xlu0 %v619, 1
        %v702 = vpop.permute.xlu0 %701
        %vm703 = vcmp.lt.s32.totalorder %v331, 1
        %v704 = vsel %vm703, %v700, %v702
        %v705 = vsel %vm703, %v702, %v700
        %706 = vrot.lane.b32.xlu0 %v638, 1
        %v707 = vpop.permute.xlu0 %706
        %708 = vrot.lane.b32.xlu0 %v639, 1
        %v709 = vpop.permute.xlu0 %708
        %v710 = vsel %vm703, %v707, %v709
        %v711 = vsel %vm703, %v709, %v707
        %s712 = scalar_lea.vmem [#allocation2], 2
        %v713 = vld [vmem:[%s712] ss:$8 sm:$0x3]
        %v715 = vlaneseq
        %v716 = vshrl.u32 %v715, 7
        %v717 = vsub.s32 0, %v716
        %v718 = vrot.slane %v713, %v717
        %v719 = vlaneseq
        %v720 = vshrl.u32 %v719, 7
        %v721 = vsub.s32 1, %v720
        %v722 = vrot.slane %v713, %v721
        %v725 = vmul.f32 %v705, %v718
        %v726 = vmul.f32 %v704, %v722
        %v727 = vmul.f32 %v711, %v718
        %v728 = vmul.f32 %v710, %v722
        %s729 = scalar_lea.vmem [#allocation2], 3
        %v730 = vld [vmem:[%s729] ss:$8 sm:$0x3]
        %v732 = vlaneseq
        %v733 = vshrl.u32 %v732, 7
        %v734 = vsub.s32 0, %v733
        %v735 = vrot.slane %v730, %v734
        %v736 = vlaneseq
        %v737 = vshrl.u32 %v736, 7
        %v738 = vsub.s32 1, %v737
        %v739 = vrot.slane %v730, %v738
        %v742 = vmul.f32 %v610, %v735
        %v743 = vmul.f32 %v619, %v739
        %v744 = vmul.f32 %v638, %v735
        %v745 = vmul.f32 %v639, %v739
        %746 = vrot.lane.b32.xlu0 %v610, 127
        %v747 = vpop.permute.xlu0 %746
        %748 = vrot.lane.b32.xlu0 %v619, 127
        %v749 = vpop.permute.xlu0 %748
        %vm750 = vcmp.lt.s32.totalorder %v331, 127
        %v751 = vsel %vm750, %v747, %v749
        %v752 = vsel %vm750, %v749, %v747
        %753 = vrot.lane.b32.xlu0 %v638, 127
        %v754 = vpop.permute.xlu0 %753
        %755 = vrot.lane.b32.xlu0 %v639, 127
        %v756 = vpop.permute.xlu0 %755
        %v757 = vsel %vm750, %v754, %v756
        %v758 = vsel %vm750, %v756, %v754
        %s759 = scalar_lea.vmem [#allocation2], 4
        %v760 = vld [vmem:[%s759] ss:$8 sm:$0x3]
        %v762 = vlaneseq
        %v763 = vshrl.u32 %v762, 7
        %v764 = vsub.s32 0, %v763
        %v765 = vrot.slane %v760, %v764
        %v766 = vlaneseq
        %v767 = vshrl.u32 %v766, 7
        %v768 = vsub.s32 1, %v767
        %v769 = vrot.slane %v760, %v768
        %v772 = vmul.f32 %v751, %v765
        %v773 = vmul.f32 %v752, %v769
        %v774 = vmul.f32 %v757, %v765
        %v775 = vmul.f32 %v758, %v769
        %776 = vrot.lane.b32.xlu0 %v610, 126
        %v777 = vpop.permute.xlu0 %776
        %778 = vrot.lane.b32.xlu0 %v619, 126
        %v779 = vpop.permute.xlu0 %778
        %vm780 = vcmp.lt.s32.totalorder %v331, 126
        %v781 = vsel %vm780, %v777, %v779
        %v782 = vsel %vm780, %v779, %v777
        %783 = vrot.lane.b32.xlu0 %v638, 126
        %v784 = vpop.permute.xlu0 %783
        %785 = vrot.lane.b32.xlu0 %v639, 126
        %v786 = vpop.permute.xlu0 %785
        %v787 = vsel %vm780, %v784, %v786
        %v788 = vsel %vm780, %v786, %v784
        %s789 = scalar_lea.vmem [#allocation2], 5
        %v790 = vld [vmem:[%s789] ss:$8 sm:$0x3]
        %v792 = vlaneseq
        %v793 = vshrl.u32 %v792, 7
        %v794 = vsub.s32 0, %v793
        %v795 = vrot.slane %v790, %v794
        %v796 = vlaneseq
        %v797 = vshrl.u32 %v796, 7
        %v798 = vsub.s32 1, %v797
        %v799 = vrot.slane %v790, %v798
        %v802 = vmul.f32 %v781, %v795
        %v803 = vmul.f32 %v782, %v799
        %v804 = vmul.f32 %v787, %v795
        %v805 = vmul.f32 %v788, %v799
        %806 = vrot.lane.b32.xlu0 %v610, 125
        %v807 = vpop.permute.xlu0 %806
        %808 = vrot.lane.b32.xlu0 %v619, 125
        %v809 = vpop.permute.xlu0 %808
        %vm810 = vcmp.lt.s32.totalorder %v331, 125
        %v811 = vsel %vm810, %v807, %v809
        %v812 = vsel %vm810, %v809, %v807
        %813 = vrot.lane.b32.xlu0 %v638, 125
        %v814 = vpop.permute.xlu0 %813
        %815 = vrot.lane.b32.xlu0 %v639, 125
        %v816 = vpop.permute.xlu0 %815
        %v817 = vsel %vm810, %v814, %v816
        %v818 = vsel %vm810, %v816, %v814
        %s819 = scalar_lea.vmem [#allocation2], 6
        %v820 = vld [vmem:[%s819] ss:$8 sm:$0x3]
        %v822 = vlaneseq
        %v823 = vshrl.u32 %v822, 7
        %v824 = vsub.s32 0, %v823
        %v825 = vrot.slane %v820, %v824
        %v826 = vlaneseq
        %v827 = vshrl.u32 %v826, 7
        %v828 = vsub.s32 1, %v827
        %v829 = vrot.slane %v820, %v828
        %v832 = vmul.f32 %v811, %v825
        %v833 = vmul.f32 %v812, %v829
        %v834 = vmul.f32 %v817, %v825
        %v835 = vmul.f32 %v818, %v829
        %s836 = sld [smem:[#allocation8]]
        %v837 = vstv %s836
        %v838 = vmul.f32 %v837, %v665
        %v839 = vmul.f32 %v837, %v666
        %s840 = sld [smem:[#allocation8 + $0x80]]
        %v841 = vstv %s840
        %v842 = vmul.f32 %v841, %v667
        %v843 = vmul.f32 %v841, %v668
        %v844 = vadd.f32 %v838, %v842
        %v845 = vadd.f32 %v839, %v843
        %s846 = sld [smem:[#allocation8 + $0x1]]
        %v847 = vstv %s846
        %v848 = vmul.f32 %v847, %v695
        %v849 = vmul.f32 %v847, %v696
        %s850 = sld [smem:[#allocation8 + $0x81]]
        %v851 = vstv %s850
        %v852 = vmul.f32 %v851, %v697
        %v853 = vmul.f32 %v851, %v698
        %v854 = vadd.f32 %v848, %v852
        %v855 = vadd.f32 %v849, %v853
        %v856 = vadd.f32 %v844, %v854
        %v857 = vadd.f32 %v845, %v855
        %s858 = sld [smem:[#allocation8 + $0x2]]
        %v859 = vstv %s858
        %v860 = vmul.f32 %v859, %v725
        %v861 = vmul.f32 %v859, %v726
        %s862 = sld [smem:[#allocation8 + $0x82]]
        %v863 = vstv %s862
        %v864 = vmul.f32 %v863, %v727
        %v865 = vmul.f32 %v863, %v728
        %v866 = vadd.f32 %v860, %v864
        %v867 = vadd.f32 %v861, %v865
        %v868 = vadd.f32 %v856, %v866
        %v869 = vadd.f32 %v857, %v867
        %s870 = sld [smem:[#allocation8 + $0x3]]
        %v871 = vstv %s870
        %v872 = vmul.f32 %v871, %v742
        %v873 = vmul.f32 %v871, %v743
        %s874 = sld [smem:[#allocation8 + $0x83]]
        %v875 = vstv %s874
        %v876 = vmul.f32 %v875, %v744
        %v877 = vmul.f32 %v875, %v745
        %v878 = vadd.f32 %v872, %v876
        %v879 = vadd.f32 %v873, %v877
        %v880 = vadd.f32 %v868, %v878
        %v881 = vadd.f32 %v869, %v879
        %s882 = sld [smem:[#allocation8 + $0x4]]
        %v883 = vstv %s882
        %v884 = vmul.f32 %v883, %v772
        %v885 = vmul.f32 %v883, %v773
        %s886 = sld [smem:[#allocation8 + $0x84]]
        %v887 = vstv %s886
        %v888 = vmul.f32 %v887, %v774
        %v889 = vmul.f32 %v887, %v775
        %v890 = vadd.f32 %v884, %v888
        %v891 = vadd.f32 %v885, %v889
        %v892 = vadd.f32 %v880, %v890
        %v893 = vadd.f32 %v881, %v891
        %s894 = sld [smem:[#allocation8 + $0x5]]
        %v895 = vstv %s894
        %v896 = vmul.f32 %v895, %v802
        %v897 = vmul.f32 %v895, %v803
        %s898 = sld [smem:[#allocation8 + $0x85]]
        %v899 = vstv %s898
        %v900 = vmul.f32 %v899, %v804
        %v901 = vmul.f32 %v899, %v805
        %v902 = vadd.f32 %v896, %v900
        %v903 = vadd.f32 %v897, %v901
        %v904 = vadd.f32 %v892, %v902
        %v905 = vadd.f32 %v893, %v903
        %s906 = sld [smem:[#allocation8 + $0x6]]
        %v907 = vstv %s906
        %v908 = vmul.f32 %v907, %v832
        %v909 = vmul.f32 %v907, %v833
        %s910 = sld [smem:[#allocation8 + $0x86]]
        %v911 = vstv %s910
        %v912 = vmul.f32 %v911, %v834
        %v913 = vmul.f32 %v911, %v835
        %v914 = vadd.f32 %v908, %v912
        %v915 = vadd.f32 %v909, %v913
        %v916 = vadd.f32 %v904, %v914
        %v917 = vadd.f32 %v905, %v915
        %918 = vrot.lane.b32.xlu0 %v916, 48
        %v919 = vpop.permute.xlu0 %918
        %920 = vrot.lane.b32.xlu0 %v917, 48
        %v921 = vpop.permute.xlu0 %920
        %vm922 = vcmp.lt.s32.totalorder %v331, 48
        %v923 = vsel %vm922, %v919, %v921
        %v924 = vsel %vm922, %v921, %v919
        %v925 = vld [vmem:[#allocation6] ss:$8 sm:$0x3]
        %v928 = vcombine.low %v924, %v923
        %v930 = vunpack.c.l.s4 1966171168
        %v931 = vunpack.c.0.s8 %v930
        %v932 = vlaneseq
        %v933 = vshrl.u32 %v932, 7
        %v934 = vsub.s32 %v931, %v933
        %v935 = vrot.slane %v928, %v934
        %v937 = vunpack.c.l.s4 1966171168
        %v938 = vunpack.c.0.s8 %v937
        %v939 = vlaneseq
        %v940 = vshrl.u32 %v939, 7
        %v941 = vsub.s32 %v938, %v940
        %v942 = vrot.slane %v935, %v941
        %v944 = vmul.f32 %v925, %v942
        %s945 = sld [smem:[#allocation8 + $0x7]]
        %v946 = vstv %s945
        %v947 = vmul.f32 %v946, %v665
        %v948 = vmul.f32 %v946, %v666
        %s949 = sld [smem:[#allocation8 + $0x87]]
        %v950 = vstv %s949
        %v951 = vmul.f32 %v950, %v667
        %v952 = vmul.f32 %v950, %v668
        %v953 = vadd.f32 %v947, %v951
        %v954 = vadd.f32 %v948, %v952
        %s955 = sld [smem:[#allocation8 + $0x8]]
        %v956 = vstv %s955
        %v957 = vmul.f32 %v956, %v695
        %v958 = vmul.f32 %v956, %v696
        %s959 = sld [smem:[#allocation8 + $0x88]]
        %v960 = vstv %s959
        %v961 = vmul.f32 %v960, %v697
        %v962 = vmul.f32 %v960, %v698
        %v963 = vadd.f32 %v957, %v961
        %v964 = vadd.f32 %v958, %v962
        %v965 = vadd.f32 %v953, %v963
        %v966 = vadd.f32 %v954, %v964
        %s967 = sld [smem:[#allocation8 + $0x9]]
        %v968 = vstv %s967
        %v969 = vmul.f32 %v968, %v725
        %v970 = vmul.f32 %v968, %v726
        %s971 = sld [smem:[#allocation8 + $0x89]]
        %v972 = vstv %s971
        %v973 = vmul.f32 %v972, %v727
        %v974 = vmul.f32 %v972, %v728
        %v975 = vadd.f32 %v969, %v973
        %v976 = vadd.f32 %v970, %v974
        %v977 = vadd.f32 %v965, %v975
        %v978 = vadd.f32 %v966, %v976
        %s979 = sld [smem:[#allocation8 + $0xa]]
        %v980 = vstv %s979
        %v981 = vmul.f32 %v980, %v742
        %v982 = vmul.f32 %v980, %v743
        %s983 = sld [smem:[#allocation8 + $0x8a]]
        %v984 = vstv %s983
        %v985 = vmul.f32 %v984, %v744
        %v986 = vmul.f32 %v984, %v745
        %v987 = vadd.f32 %v981, %v985
        %v988 = vadd.f32 %v982, %v986
        %v989 = vadd.f32 %v977, %v987
        %v990 = vadd.f32 %v978, %v988
        %s991 = sld [smem:[#allocation8 + $0xb]]
        %v992 = vstv %s991
        %v993 = vmul.f32 %v992, %v772
        %v994 = vmul.f32 %v992, %v773
        %s995 = sld [smem:[#allocation8 + $0x8b]]
        %v996 = vstv %s995
        %v997 = vmul.f32 %v996, %v774
        %v998 = vmul.f32 %v996, %v775
        %v999 = vadd.f32 %v993, %v997
        %v1000 = vadd.f32 %v994, %v998
        %v1001 = vadd.f32 %v989, %v999
        %v1002 = vadd.f32 %v990, %v1000
        %s1003 = sld [smem:[#allocation8 + $0xc]]
        %v1004 = vstv %s1003
        %v1005 = vmul.f32 %v1004, %v802
        %v1006 = vmul.f32 %v1004, %v803
        %s1007 = sld [smem:[#allocation8 + $0x8c]]
        %v1008 = vstv %s1007
        %v1009 = vmul.f32 %v1008, %v804
        %v1010 = vmul.f32 %v1008, %v805
        %v1011 = vadd.f32 %v1005, %v1009
        %v1012 = vadd.f32 %v1006, %v1010
        %v1013 = vadd.f32 %v1001, %v1011
        %v1014 = vadd.f32 %v1002, %v1012
        %s1015 = sld [smem:[#allocation8 + $0xd]]
        %v1016 = vstv %s1015
        %v1017 = vmul.f32 %v1016, %v832
        %v1018 = vmul.f32 %v1016, %v833
        %s1019 = sld [smem:[#allocation8 + $0x8d]]
        %v1020 = vstv %s1019
        %v1021 = vmul.f32 %v1020, %v834
        %v1022 = vmul.f32 %v1020, %v835
        %v1023 = vadd.f32 %v1017, %v1021
        %v1024 = vadd.f32 %v1018, %v1022
        %v1025 = vadd.f32 %v1013, %v1023
        %v1026 = vadd.f32 %v1014, %v1024
        %1027 = vrot.lane.b32.xlu0 %v1025, 32
        %v1028 = vpop.permute.xlu0 %1027
        %1029 = vrot.lane.b32.xlu0 %v1026, 32
        %v1030 = vpop.permute.xlu0 %1029
        %vm1031 = vcmp.lt.s32.totalorder %v331, 32
        %v1032 = vsel %vm1031, %v1028, %v1030
        %v1033 = vsel %vm1031, %v1030, %v1028
        %s1034 = scalar_lea.vmem [#allocation6], 1
        %v1035 = vld [vmem:[%s1034] ss:$8 sm:$0x3]
        %v1038 = vcombine.low %v1033, %v1032
        %v1040 = vunpack.c.l.s4 1966171168
        %v1041 = vunpack.c.0.s8 %v1040
        %v1042 = vlaneseq
        %v1043 = vshrl.u32 %v1042, 7
        %v1044 = vsub.s32 %v1041, %v1043
        %v1045 = vrot.slane %v1038, %v1044
        %v1047 = vunpack.c.l.s4 1966171168
        %v1048 = vunpack.c.0.s8 %v1047
        %v1049 = vlaneseq
        %v1050 = vshrl.u32 %v1049, 7
        %v1051 = vsub.s32 %v1048, %v1050
        %v1052 = vrot.slane %v1045, %v1051
        %v1054 = vmul.f32 %v1035, %v1052
        %v1055 = vadd.f32 %v944, %v1054
        %s1056 = sld [smem:[#allocation8 + $0xe]]
        %v1057 = vstv %s1056
        %v1058 = vmul.f32 %v1057, %v665
        %v1059 = vmul.f32 %v1057, %v666
        %s1060 = sld [smem:[#allocation8 + $0x8e]]
        %v1061 = vstv %s1060
        %v1062 = vmul.f32 %v1061, %v667
        %v1063 = vmul.f32 %v1061, %v668
        %v1064 = vadd.f32 %v1058, %v1062
        %v1065 = vadd.f32 %v1059, %v1063
        %s1066 = sld [smem:[#allocation8 + $0xf]]
        %v1067 = vstv %s1066
        %v1068 = vmul.f32 %v1067, %v695
        %v1069 = vmul.f32 %v1067, %v696
        %s1070 = sld [smem:[#allocation8 + $0x8f]]
        %v1071 = vstv %s1070
        %v1072 = vmul.f32 %v1071, %v697
        %v1073 = vmul.f32 %v1071, %v698
        %v1074 = vadd.f32 %v1068, %v1072
        %v1075 = vadd.f32 %v1069, %v1073
        %v1076 = vadd.f32 %v1064, %v1074
        %v1077 = vadd.f32 %v1065, %v1075
        %s1078 = sld [smem:[#allocation8 + $0x10]]
        %v1079 = vstv %s1078
        %v1080 = vmul.f32 %v1079, %v725
        %v1081 = vmul.f32 %v1079, %v726
        %s1082 = sld [smem:[#allocation8 + $0x90]]
        %v1083 = vstv %s1082
        %v1084 = vmul.f32 %v1083, %v727
        %v1085 = vmul.f32 %v1083, %v728
        %v1086 = vadd.f32 %v1080, %v1084
        %v1087 = vadd.f32 %v1081, %v1085
        %v1088 = vadd.f32 %v1076, %v1086
        %v1089 = vadd.f32 %v1077, %v1087
        %s1090 = sld [smem:[#allocation8 + $0x11]]
        %v1091 = vstv %s1090
        %v1092 = vmul.f32 %v1091, %v742
        %v1093 = vmul.f32 %v1091, %v743
        %s1094 = sld [smem:[#allocation8 + $0x91]]
        %v1095 = vstv %s1094
        %v1096 = vmul.f32 %v1095, %v744
        %v1097 = vmul.f32 %v1095, %v745
        %v1098 = vadd.f32 %v1092, %v1096
        %v1099 = vadd.f32 %v1093, %v1097
        %v1100 = vadd.f32 %v1088, %v1098
        %v1101 = vadd.f32 %v1089, %v1099
        %s1102 = sld [smem:[#allocation8 + $0x12]]
        %v1103 = vstv %s1102
        %v1104 = vmul.f32 %v1103, %v772
        %v1105 = vmul.f32 %v1103, %v773
        %s1106 = sld [smem:[#allocation8 + $0x92]]
        %v1107 = vstv %s1106
        %v1108 = vmul.f32 %v1107, %v774
        %v1109 = vmul.f32 %v1107, %v775
        %v1110 = vadd.f32 %v1104, %v1108
        %v1111 = vadd.f32 %v1105, %v1109
        %v1112 = vadd.f32 %v1100, %v1110
        %v1113 = vadd.f32 %v1101, %v1111
        %s1114 = sld [smem:[#allocation8 + $0x13]]
        %v1115 = vstv %s1114
        %v1116 = vmul.f32 %v1115, %v802
        %v1117 = vmul.f32 %v1115, %v803
        %s1118 = sld [smem:[#allocation8 + $0x93]]
        %v1119 = vstv %s1118
        %v1120 = vmul.f32 %v1119, %v804
        %v1121 = vmul.f32 %v1119, %v805
        %v1122 = vadd.f32 %v1116, %v1120
        %v1123 = vadd.f32 %v1117, %v1121
        %v1124 = vadd.f32 %v1112, %v1122
        %v1125 = vadd.f32 %v1113, %v1123
        %s1126 = sld [smem:[#allocation8 + $0x14]]
        %v1127 = vstv %s1126
        %v1128 = vmul.f32 %v1127, %v832
        %v1129 = vmul.f32 %v1127, %v833
        %s1130 = sld [smem:[#allocation8 + $0x94]]
        %v1131 = vstv %s1130
        %v1132 = vmul.f32 %v1131, %v834
        %v1133 = vmul.f32 %v1131, %v835
        %v1134 = vadd.f32 %v1128, %v1132
        %v1135 = vadd.f32 %v1129, %v1133
        %v1136 = vadd.f32 %v1124, %v1134
        %v1137 = vadd.f32 %v1125, %v1135
        %1138 = vrot.lane.b32.xlu0 %v1136, 16
        %v1139 = vpop.permute.xlu0 %1138
        %1140 = vrot.lane.b32.xlu0 %v1137, 16
        %v1141 = vpop.permute.xlu0 %1140
        %vm1142 = vcmp.lt.s32.totalorder %v331, 16
        %v1143 = vsel %vm1142, %v1139, %v1141
        %v1144 = vsel %vm1142, %v1141, %v1139
        %s1145 = scalar_lea.vmem [#allocation6], 2
        %v1146 = vld [vmem:[%s1145] ss:$8 sm:$0x3]
        %v1149 = vcombine.low %v1144, %v1143
        %v1151 = vunpack.c.l.s4 1966171168
        %v1152 = vunpack.c.0.s8 %v1151
        %v1153 = vlaneseq
        %v1154 = vshrl.u32 %v1153, 7
        %v1155 = vsub.s32 %v1152, %v1154
        %v1156 = vrot.slane %v1149, %v1155
        %v1158 = vunpack.c.l.s4 1966171168
        %v1159 = vunpack.c.0.s8 %v1158
        %v1160 = vlaneseq
        %v1161 = vshrl.u32 %v1160, 7
        %v1162 = vsub.s32 %v1159, %v1161
        %v1163 = vrot.slane %v1156, %v1162
        %v1165 = vmul.f32 %v1146, %v1163
        %v1166 = vadd.f32 %v1055, %v1165
        %s1167 = sld [smem:[#allocation8 + $0x15]]
        %v1168 = vstv %s1167
        %v1169 = vmul.f32 %v1168, %v665
        %v1170 = vmul.f32 %v1168, %v666
        %s1171 = sld [smem:[#allocation8 + $0x95]]
        %v1172 = vstv %s1171
        %v1173 = vmul.f32 %v1172, %v667
        %v1174 = vmul.f32 %v1172, %v668
        %v1175 = vadd.f32 %v1169, %v1173
        %v1176 = vadd.f32 %v1170, %v1174
        %s1177 = sld [smem:[#allocation8 + $0x16]]
        %v1178 = vstv %s1177
        %v1179 = vmul.f32 %v1178, %v695
        %v1180 = vmul.f32 %v1178, %v696
        %s1181 = sld [smem:[#allocation8 + $0x96]]
        %v1182 = vstv %s1181
        %v1183 = vmul.f32 %v1182, %v697
        %v1184 = vmul.f32 %v1182, %v698
        %v1185 = vadd.f32 %v1179, %v1183
        %v1186 = vadd.f32 %v1180, %v1184
        %v1187 = vadd.f32 %v1175, %v1185
        %v1188 = vadd.f32 %v1176, %v1186
        %s1189 = sld [smem:[#allocation8 + $0x17]]
        %v1190 = vstv %s1189
        %v1191 = vmul.f32 %v1190, %v725
        %v1192 = vmul.f32 %v1190, %v726
        %s1193 = sld [smem:[#allocation8 + $0x97]]
        %v1194 = vstv %s1193
        %v1195 = vmul.f32 %v1194, %v727
        %v1196 = vmul.f32 %v1194, %v728
        %v1197 = vadd.f32 %v1191, %v1195
        %v1198 = vadd.f32 %v1192, %v1196
        %v1199 = vadd.f32 %v1187, %v1197
        %v1200 = vadd.f32 %v1188, %v1198
        %s1201 = sld [smem:[#allocation8 + $0x18]]
        %v1202 = vstv %s1201
        %v1203 = vmul.f32 %v1202, %v742
        %v1204 = vmul.f32 %v1202, %v743
        %s1205 = sld [smem:[#allocation8 + $0x98]]
        %v1206 = vstv %s1205
        %v1207 = vmul.f32 %v1206, %v744
        %v1208 = vmul.f32 %v1206, %v745
        %v1209 = vadd.f32 %v1203, %v1207
        %v1210 = vadd.f32 %v1204, %v1208
        %v1211 = vadd.f32 %v1199, %v1209
        %v1212 = vadd.f32 %v1200, %v1210
        %s1213 = sld [smem:[#allocation8 + $0x19]]
        %v1214 = vstv %s1213
        %v1215 = vmul.f32 %v1214, %v772
        %v1216 = vmul.f32 %v1214, %v773
        %s1217 = sld [smem:[#allocation8 + $0x99]]
        %v1218 = vstv %s1217
        %v1219 = vmul.f32 %v1218, %v774
        %v1220 = vmul.f32 %v1218, %v775
        %v1221 = vadd.f32 %v1215, %v1219
        %v1222 = vadd.f32 %v1216, %v1220
        %v1223 = vadd.f32 %v1211, %v1221
        %v1224 = vadd.f32 %v1212, %v1222
        %s1225 = sld [smem:[#allocation8 + $0x1a]]
        %v1226 = vstv %s1225
        %v1227 = vmul.f32 %v1226, %v802
        %v1228 = vmul.f32 %v1226, %v803
        %s1229 = sld [smem:[#allocation8 + $0x9a]]
        %v1230 = vstv %s1229
        %v1231 = vmul.f32 %v1230, %v804
        %v1232 = vmul.f32 %v1230, %v805
        %v1233 = vadd.f32 %v1227, %v1231
        %v1234 = vadd.f32 %v1228, %v1232
        %v1235 = vadd.f32 %v1223, %v1233
        %v1236 = vadd.f32 %v1224, %v1234
        %s1237 = sld [smem:[#allocation8 + $0x1b]]
        %v1238 = vstv %s1237
        %v1239 = vmul.f32 %v1238, %v832
        %v1240 = vmul.f32 %v1238, %v833
        %s1241 = sld [smem:[#allocation8 + $0x9b]]
        %v1242 = vstv %s1241
        %v1243 = vmul.f32 %v1242, %v834
        %v1244 = vmul.f32 %v1242, %v835
        %v1245 = vadd.f32 %v1239, %v1243
        %v1246 = vadd.f32 %v1240, %v1244
        %v1247 = vadd.f32 %v1235, %v1245
        %v1248 = vadd.f32 %v1236, %v1246
        %s1249 = scalar_lea.vmem [#allocation6], 3
        %v1250 = vld [vmem:[%s1249] ss:$8 sm:$0x3]
        %v1253 = vcombine.low %v1247, %v1248
        %v1255 = vunpack.c.l.s4 1966171168
        %v1256 = vunpack.c.0.s8 %v1255
        %v1257 = vlaneseq
        %v1258 = vshrl.u32 %v1257, 7
        %v1259 = vsub.s32 %v1256, %v1258
        %v1260 = vrot.slane %v1253, %v1259
        %v1262 = vunpack.c.l.s4 1966171168
        %v1263 = vunpack.c.0.s8 %v1262
        %v1264 = vlaneseq
        %v1265 = vshrl.u32 %v1264, 7
        %v1266 = vsub.s32 %v1263, %v1265
        %v1267 = vrot.slane %v1260, %v1266
        %v1269 = vmul.f32 %v1250, %v1267
        %v1270 = vadd.f32 %v1166, %v1269
        %s1271 = sld [smem:[#allocation8 + $0x1c]]
        %v1272 = vstv %s1271
        %v1273 = vmul.f32 %v1272, %v665
        %v1274 = vmul.f32 %v1272, %v666
        %s1275 = sld [smem:[#allocation8 + $0x9c]]
        %v1276 = vstv %s1275
        %v1277 = vmul.f32 %v1276, %v667
        %v1278 = vmul.f32 %v1276, %v668
        %v1279 = vadd.f32 %v1273, %v1277
        %v1280 = vadd.f32 %v1274, %v1278
        %s1281 = sld [smem:[#allocation8 + $0x1d]]
        %v1282 = vstv %s1281
        %v1283 = vmul.f32 %v1282, %v695
        %v1284 = vmul.f32 %v1282, %v696
        %s1285 = sld [smem:[#allocation8 + $0x9d]]
        %v1286 = vstv %s1285
        %v1287 = vmul.f32 %v1286, %v697
        %v1288 = vmul.f32 %v1286, %v698
        %v1289 = vadd.f32 %v1283, %v1287
        %v1290 = vadd.f32 %v1284, %v1288
        %v1291 = vadd.f32 %v1279, %v1289
        %v1292 = vadd.f32 %v1280, %v1290
        %s1293 = sld [smem:[#allocation8 + $0x1e]]
        %v1294 = vstv %s1293
        %v1295 = vmul.f32 %v1294, %v725
        %v1296 = vmul.f32 %v1294, %v726
        %s1297 = sld [smem:[#allocation8 + $0x9e]]
        %v1298 = vstv %s1297
        %v1299 = vmul.f32 %v1298, %v727
        %v1300 = vmul.f32 %v1298, %v728
        %v1301 = vadd.f32 %v1295, %v1299
        %v1302 = vadd.f32 %v1296, %v1300
        %v1303 = vadd.f32 %v1291, %v1301
        %v1304 = vadd.f32 %v1292, %v1302
        %s1305 = sld [smem:[#allocation8 + $0x1f]]
        %v1306 = vstv %s1305
        %v1307 = vmul.f32 %v1306, %v742
        %v1308 = vmul.f32 %v1306, %v743
        %s1309 = sld [smem:[#allocation8 + $0x9f]]
        %v1310 = vstv %s1309
        %v1311 = vmul.f32 %v1310, %v744
        %v1312 = vmul.f32 %v1310, %v745
        %v1313 = vadd.f32 %v1307, %v1311
        %v1314 = vadd.f32 %v1308, %v1312
        %v1315 = vadd.f32 %v1303, %v1313
        %v1316 = vadd.f32 %v1304, %v1314
        %s1317 = sld [smem:[#allocation8 + $0x20]]
        %v1318 = vstv %s1317
        %v1319 = vmul.f32 %v1318, %v772
        %v1320 = vmul.f32 %v1318, %v773
        %s1321 = sld [smem:[#allocation8 + $0xa0]]
        %v1322 = vstv %s1321
        %v1323 = vmul.f32 %v1322, %v774
        %v1324 = vmul.f32 %v1322, %v775
        %v1325 = vadd.f32 %v1319, %v1323
        %v1326 = vadd.f32 %v1320, %v1324
        %v1327 = vadd.f32 %v1315, %v1325
        %v1328 = vadd.f32 %v1316, %v1326
        %s1329 = sld [smem:[#allocation8 + $0x21]]
        %v1330 = vstv %s1329
        %v1331 = vmul.f32 %v1330, %v802
        %v1332 = vmul.f32 %v1330, %v803
        %s1333 = sld [smem:[#allocation8 + $0xa1]]
        %v1334 = vstv %s1333
        %v1335 = vmul.f32 %v1334, %v804
        %v1336 = vmul.f32 %v1334, %v805
        %v1337 = vadd.f32 %v1331, %v1335
        %v1338 = vadd.f32 %v1332, %v1336
        %v1339 = vadd.f32 %v1327, %v1337
        %v1340 = vadd.f32 %v1328, %v1338
        %s1341 = sld [smem:[#allocation8 + $0x22]]
        %v1342 = vstv %s1341
        %v1343 = vmul.f32 %v1342, %v832
        %v1344 = vmul.f32 %v1342, %v833
        %s1345 = sld [smem:[#allocation8 + $0xa2]]
        %v1346 = vstv %s1345
        %v1347 = vmul.f32 %v1346, %v834
        %v1348 = vmul.f32 %v1346, %v835
        %v1349 = vadd.f32 %v1343, %v1347
        %v1350 = vadd.f32 %v1344, %v1348
        %v1351 = vadd.f32 %v1339, %v1349
        %v1352 = vadd.f32 %v1340, %v1350
        %1353 = vrot.lane.b32.xlu0 %v1351, 112
        %v1354 = vpop.permute.xlu0 %1353
        %1355 = vrot.lane.b32.xlu0 %v1352, 112
        %v1356 = vpop.permute.xlu0 %1355
        %vm1357 = vcmp.lt.s32.totalorder %v331, 112
        %v1358 = vsel %vm1357, %v1354, %v1356
        %v1359 = vsel %vm1357, %v1356, %v1354
        %s1360 = scalar_lea.vmem [#allocation6], 4
        %v1361 = vld [vmem:[%s1360] ss:$8 sm:$0x3]
        %v1364 = vcombine.low %v1358, %v1359
        %v1366 = vunpack.c.l.s4 1966171168
        %v1367 = vunpack.c.0.s8 %v1366
        %v1368 = vlaneseq
        %v1369 = vshrl.u32 %v1368, 7
        %v1370 = vsub.s32 %v1367, %v1369
        %v1371 = vrot.slane %v1364, %v1370
        %v1373 = vunpack.c.l.s4 1966171168
        %v1374 = vunpack.c.0.s8 %v1373
        %v1375 = vlaneseq
        %v1376 = vshrl.u32 %v1375, 7
        %v1377 = vsub.s32 %v1374, %v1376
        %v1378 = vrot.slane %v1371, %v1377
        %v1380 = vmul.f32 %v1361, %v1378
        %v1381 = vadd.f32 %v1270, %v1380
        %s1382 = sld [smem:[#allocation8 + $0x23]]
        %v1383 = vstv %s1382
        %v1384 = vmul.f32 %v1383, %v665
        %v1385 = vmul.f32 %v1383, %v666
        %s1386 = sld [smem:[#allocation8 + $0xa3]]
        %v1387 = vstv %s1386
        %v1388 = vmul.f32 %v1387, %v667
        %v1389 = vmul.f32 %v1387, %v668
        %v1390 = vadd.f32 %v1384, %v1388
        %v1391 = vadd.f32 %v1385, %v1389
        %s1392 = sld [smem:[#allocation8 + $0x24]]
        %v1393 = vstv %s1392
        %v1394 = vmul.f32 %v1393, %v695
        %v1395 = vmul.f32 %v1393, %v696
        %s1396 = sld [smem:[#allocation8 + $0xa4]]
        %v1397 = vstv %s1396
        %v1398 = vmul.f32 %v1397, %v697
        %v1399 = vmul.f32 %v1397, %v698
        %v1400 = vadd.f32 %v1394, %v1398
        %v1401 = vadd.f32 %v1395, %v1399
        %v1402 = vadd.f32 %v1390, %v1400
        %v1403 = vadd.f32 %v1391, %v1401
        %s1404 = sld [smem:[#allocation8 + $0x25]]
        %v1405 = vstv %s1404
        %v1406 = vmul.f32 %v1405, %v725
        %v1407 = vmul.f32 %v1405, %v726
        %s1408 = sld [smem:[#allocation8 + $0xa5]]
        %v1409 = vstv %s1408
        %v1410 = vmul.f32 %v1409, %v727
        %v1411 = vmul.f32 %v1409, %v728
        %v1412 = vadd.f32 %v1406, %v1410
        %v1413 = vadd.f32 %v1407, %v1411
        %v1414 = vadd.f32 %v1402, %v1412
        %v1415 = vadd.f32 %v1403, %v1413
        %s1416 = sld [smem:[#allocation8 + $0x26]]
        %v1417 = vstv %s1416
        %v1418 = vmul.f32 %v1417, %v742
        %v1419 = vmul.f32 %v1417, %v743
        %s1420 = sld [smem:[#allocation8 + $0xa6]]
        %v1421 = vstv %s1420
        %v1422 = vmul.f32 %v1421, %v744
        %v1423 = vmul.f32 %v1421, %v745
        %v1424 = vadd.f32 %v1418, %v1422
        %v1425 = vadd.f32 %v1419, %v1423
        %v1426 = vadd.f32 %v1414, %v1424
        %v1427 = vadd.f32 %v1415, %v1425
        %s1428 = sld [smem:[#allocation8 + $0x27]]
        %v1429 = vstv %s1428
        %v1430 = vmul.f32 %v1429, %v772
        %v1431 = vmul.f32 %v1429, %v773
        %s1432 = sld [smem:[#allocation8 + $0xa7]]
        %v1433 = vstv %s1432
        %v1434 = vmul.f32 %v1433, %v774
        %v1435 = vmul.f32 %v1433, %v775
        %v1436 = vadd.f32 %v1430, %v1434
        %v1437 = vadd.f32 %v1431, %v1435
        %v1438 = vadd.f32 %v1426, %v1436
        %v1439 = vadd.f32 %v1427, %v1437
        %s1440 = sld [smem:[#allocation8 + $0x28]]
        %v1441 = vstv %s1440
        %v1442 = vmul.f32 %v1441, %v802
        %v1443 = vmul.f32 %v1441, %v803
        %s1444 = sld [smem:[#allocation8 + $0xa8]]
        %v1445 = vstv %s1444
        %v1446 = vmul.f32 %v1445, %v804
        %v1447 = vmul.f32 %v1445, %v805
        %v1448 = vadd.f32 %v1442, %v1446
        %v1449 = vadd.f32 %v1443, %v1447
        %v1450 = vadd.f32 %v1438, %v1448
        %v1451 = vadd.f32 %v1439, %v1449
        %s1452 = sld [smem:[#allocation8 + $0x29]]
        %v1453 = vstv %s1452
        %v1454 = vmul.f32 %v1453, %v832
        %v1455 = vmul.f32 %v1453, %v833
        %s1456 = sld [smem:[#allocation8 + $0xa9]]
        %v1457 = vstv %s1456
        %v1458 = vmul.f32 %v1457, %v834
        %v1459 = vmul.f32 %v1457, %v835
        %v1460 = vadd.f32 %v1454, %v1458
        %v1461 = vadd.f32 %v1455, %v1459
        %v1462 = vadd.f32 %v1450, %v1460
        %v1463 = vadd.f32 %v1451, %v1461
        %1464 = vrot.lane.b32.xlu0 %v1462, 96
        %v1465 = vpop.permute.xlu0 %1464
        %1466 = vrot.lane.b32.xlu0 %v1463, 96
        %v1467 = vpop.permute.xlu0 %1466
        %vm1468 = vcmp.lt.s32.totalorder %v331, 96
        %v1469 = vsel %vm1468, %v1465, %v1467
        %v1470 = vsel %vm1468, %v1467, %v1465
        %s1471 = scalar_lea.vmem [#allocation6], 5
        %v1472 = vld [vmem:[%s1471] ss:$8 sm:$0x3]
        %v1475 = vcombine.low %v1469, %v1470
        %v1477 = vunpack.c.l.s4 1966171168
        %v1478 = vunpack.c.0.s8 %v1477
        %v1479 = vlaneseq
        %v1480 = vshrl.u32 %v1479, 7
        %v1481 = vsub.s32 %v1478, %v1480
        %v1482 = vrot.slane %v1475, %v1481
        %v1484 = vunpack.c.l.s4 1966171168
        %v1485 = vunpack.c.0.s8 %v1484
        %v1486 = vlaneseq
        %v1487 = vshrl.u32 %v1486, 7
        %v1488 = vsub.s32 %v1485, %v1487
        %v1489 = vrot.slane %v1482, %v1488
        %v1491 = vmul.f32 %v1472, %v1489
        %v1492 = vadd.f32 %v1381, %v1491
        %s1493 = sld [smem:[#allocation8 + $0x2a]]
        %v1494 = vstv %s1493
        %v1495 = vmul.f32 %v1494, %v665
        %v1496 = vmul.f32 %v1494, %v666
        %s1497 = sld [smem:[#allocation8 + $0xaa]]
        %v1498 = vstv %s1497
        %v1499 = vmul.f32 %v1498, %v667
        %v1500 = vmul.f32 %v1498, %v668
        %v1501 = vadd.f32 %v1495, %v1499
        %v1502 = vadd.f32 %v1496, %v1500
        %s1503 = sld [smem:[#allocation8 + $0x2b]]
        %v1504 = vstv %s1503
        %v1505 = vmul.f32 %v1504, %v695
        %v1506 = vmul.f32 %v1504, %v696
        %s1507 = sld [smem:[#allocation8 + $0xab]]
        %v1508 = vstv %s1507
        %v1509 = vmul.f32 %v1508, %v697
        %v1510 = vmul.f32 %v1508, %v698
        %v1511 = vadd.f32 %v1505, %v1509
        %v1512 = vadd.f32 %v1506, %v1510
        %v1513 = vadd.f32 %v1501, %v1511
        %v1514 = vadd.f32 %v1502, %v1512
        %s1515 = sld [smem:[#allocation8 + $0x2c]]
        %v1516 = vstv %s1515
        %v1517 = vmul.f32 %v1516, %v725
        %v1518 = vmul.f32 %v1516, %v726
        %s1519 = sld [smem:[#allocation8 + $0xac]]
        %v1520 = vstv %s1519
        %v1521 = vmul.f32 %v1520, %v727
        %v1522 = vmul.f32 %v1520, %v728
        %v1523 = vadd.f32 %v1517, %v1521
        %v1524 = vadd.f32 %v1518, %v1522
        %v1525 = vadd.f32 %v1513, %v1523
        %v1526 = vadd.f32 %v1514, %v1524
        %s1527 = sld [smem:[#allocation8 + $0x2d]]
        %v1528 = vstv %s1527
        %v1529 = vmul.f32 %v1528, %v742
        %v1530 = vmul.f32 %v1528, %v743
        %s1531 = sld [smem:[#allocation8 + $0xad]]
        %v1532 = vstv %s1531
        %v1533 = vmul.f32 %v1532, %v744
        %v1534 = vmul.f32 %v1532, %v745
        %v1535 = vadd.f32 %v1529, %v1533
        %v1536 = vadd.f32 %v1530, %v1534
        %v1537 = vadd.f32 %v1525, %v1535
        %v1538 = vadd.f32 %v1526, %v1536
        %s1539 = sld [smem:[#allocation8 + $0x2e]]
        %v1540 = vstv %s1539
        %v1541 = vmul.f32 %v1540, %v772
        %v1542 = vmul.f32 %v1540, %v773
        %s1543 = sld [smem:[#allocation8 + $0xae]]
        %v1544 = vstv %s1543
        %v1545 = vmul.f32 %v1544, %v774
        %v1546 = vmul.f32 %v1544, %v775
        %v1547 = vadd.f32 %v1541, %v1545
        %v1548 = vadd.f32 %v1542, %v1546
        %v1549 = vadd.f32 %v1537, %v1547
        %v1550 = vadd.f32 %v1538, %v1548
        %s1551 = sld [smem:[#allocation8 + $0x2f]]
        %v1552 = vstv %s1551
        %v1553 = vmul.f32 %v1552, %v802
        %v1554 = vmul.f32 %v1552, %v803
        %s1555 = sld [smem:[#allocation8 + $0xaf]]
        %v1556 = vstv %s1555
        %v1557 = vmul.f32 %v1556, %v804
        %v1558 = vmul.f32 %v1556, %v805
        %v1559 = vadd.f32 %v1553, %v1557
        %v1560 = vadd.f32 %v1554, %v1558
        %v1561 = vadd.f32 %v1549, %v1559
        %v1562 = vadd.f32 %v1550, %v1560
        %s1563 = sld [smem:[#allocation8 + $0x30]]
        %v1564 = vstv %s1563
        %v1565 = vmul.f32 %v1564, %v832
        %v1566 = vmul.f32 %v1564, %v833
        %s1567 = sld [smem:[#allocation8 + $0xb0]]
        %v1568 = vstv %s1567
        %v1569 = vmul.f32 %v1568, %v834
        %v1570 = vmul.f32 %v1568, %v835
        %v1571 = vadd.f32 %v1565, %v1569
        %v1572 = vadd.f32 %v1566, %v1570
        %v1573 = vadd.f32 %v1561, %v1571
        %v1574 = vadd.f32 %v1562, %v1572
        %1575 = vrot.lane.b32.xlu0 %v1573, 80
        %v1576 = vpop.permute.xlu0 %1575
        %1577 = vrot.lane.b32.xlu0 %v1574, 80
        %v1578 = vpop.permute.xlu0 %1577
        %vm1579 = vcmp.lt.s32.totalorder %v331, 80
        %v1580 = vsel %vm1579, %v1576, %v1578
        %v1581 = vsel %vm1579, %v1578, %v1576
        %s1582 = scalar_lea.vmem [#allocation6], 6
        %v1583 = vld [vmem:[%s1582] ss:$8 sm:$0x3]
        %v1586 = vcombine.low %v1580, %v1581
        %v1588 = vunpack.c.l.s4 1966171168
        %v1589 = vunpack.c.0.s8 %v1588
        %v1590 = vlaneseq
        %v1591 = vshrl.u32 %v1590, 7
        %v1592 = vsub.s32 %v1589, %v1591
        %v1593 = vrot.slane %v1586, %v1592
        %v1595 = vunpack.c.l.s4 1966171168
        %v1596 = vunpack.c.0.s8 %v1595
        %v1597 = vlaneseq
        %v1598 = vshrl.u32 %v1597, 7
        %v1599 = vsub.s32 %v1596, %v1598
        %v1600 = vrot.slane %v1593, %v1599
        %v1602 = vmul.f32 %v1583, %v1600
        %v1603 = vadd.f32 %v1492, %v1602
        %v1604 = vxor.u32 %v1603, 2147483648
        %v1605 = vmul.f32 %v1604, 1.442695
        %v1606 = vpow.pop %v1605
        %v1607 = vadd.f32 %v1606, 1.0
        %v1608 = vrcp.pop %v1607
        %v1609 = vmul.f32 1.0, %v1608
        %v1611 = vlaneseq
        %v1612 = vshrl.u32 %v1611, 7
        %v1613 = vsub.s32 0, %v1612
        %v1614 = vrot.slane %v1609, %v1613
        %v1615 = vlaneseq
        %v1616 = vshrl.u32 %v1615, 7
        %v1617 = vsub.s32 1, %v1616
        %v1618 = vrot.slane %v1609, %v1617
        %v1621 = vmul.f32 %v594, %v1614
        %v1622 = vmul.f32 %v595, %v1618
        %v1623 = vmul.f32 %v596, %v1614
        %v1624 = vmul.f32 %v597, %v1618
        %v1625 = vmul.f32 %v598, %v1614
        %v1626 = vmul.f32 %v599, %v1618
        %v1627 = vmul.f32 %v600, %v1614
        %v1628 = vmul.f32 %v601, %v1618
        %1629 = vst [vmem:[%s284] sm:$0xff] %v1621
        %1630 = vst [vmem:[%s284 + $0x8] sm:$0xff] %v1622
        %1631 = vst [vmem:[%s284 + $0x10] sm:$0xff] %v1623
        %1632 = vst [vmem:[%s284 + $0x18] sm:$0xff] %v1624
        %1633 = vst [vmem:[%s284 + $0x20] sm:$0xff] %v1625
        %1634 = vst [vmem:[%s284 + $0x28] sm:$0xff] %v1626
        %1635 = vst [vmem:[%s284 + $0x30] sm:$0xff] %v1627
        %1636 = vst [vmem:[%s284 + $0x38] sm:$0xff] %v1628
        %s1637 = sand.u32 %s162, 1
        %s1638 = scalar_lea.sflag [#allocation4], %s1637
        %s1639 = sand.u32 %s162, 1
        %s1640 = smul.addr %s1639, 64
        %s1641 = scalar_lea.vmem [#allocation9], %s1640
        // Predicated region
        $region57: #{tpu_custom_call.1} parent=43 // pred_check
          %p1642 = pneg %p172
        $region58: #{tpu_custom_call.1} parent=43 // pred_check_branch
          %1644 = sbr.rel (%p1642) target = $region60
        $region59: #{tpu_custom_call.1} parent=43 // pred_region
          %s1646 = ssub.s32 1024, 1024
          %1647 = vsyncadd %s1638, %s1646
          %s1648 = smul.addr %s23, 8
          %s1649 = smul.addr %s1648, 128
          %s1650 = scalar_lea.hbm %s6, %s1649
          %s1651 = sshll.u32 %s1641, 4
          %s1652 = int_to_ptr.vmem [resolvable:$true] %s1651
          %1657 = dma.vmem_to_hbm [thread:$0]  %s1652, 1024, %s1650, %s1638, 256, 256, 16
        $region60: #{tpu_custom_call.1} parent=43 // pred_fallthru
          _
      $region44: #{tpu_custom_call.1} parent=5 // pred_fallthru
        _
      %p1658 = scmp.le.s32.totalorder 2, %s18
      // Predicated region
      $region61: #{tpu_custom_call.1} parent=5 // pred_check
        %p1659 = pneg %p1658
      $region62: #{tpu_custom_call.1} parent=5 // pred_check_branch
        %1661 = sbr.rel (%p1659) target = $region64
      $region63: #{tpu_custom_call.1} parent=5 // pred_region
        %s1662 = ssub.s32 %s18, 2
        // Predicated region
        $region65: #{tpu_custom_call.1} parent=63 // pred_check
          %p1663 = pneg %p178
        $region66: #{tpu_custom_call.1} parent=63 // pred_check_branch
          %1665 = sbr.rel (%p1663) target = $region68
        $region67: #{tpu_custom_call.1} parent=63 // pred_region
          %s1666 = sand.u32 %s163, 1
          %s1667 = scalar_lea.sflag [#allocation4], %s1666
          %s1668 = sand.u32 %s163, 1
          %s1669 = smul.addr %s1668, 64
          %s1670 = scalar_lea.vmem [#allocation9], %s1669
          %1671 = dma.done %s1667, 1024
        $region68: #{tpu_custom_call.1} parent=63 // pred_fallthru
          _
      $region64: #{tpu_custom_call.1} parent=5 // pred_fallthru
        _
    $region6: #{tpu_custom_call.1} parent=1 // loop_footer
      %s22 = sadd.s32 1, %s18
    $region7: #{tpu_custom_call.1} parent=1 // loop_footer_branch
      %17 = sbr.rel target = $region3
    $region8: #{tpu_custom_call.1} parent=1 // loop_exit
      _
    %1672 = vsyncpa [#allocation3], 1
    %s1673 = scalar_lea.sflag [#allocation3], 1
    %1674 = vsyncpa %s1673, 1
    %1675 = vsyncpa [#allocation7], 1
    %1676 = vsyncpa [#allocation4], 1
    %s1677 = scalar_lea.sflag [#allocation4], 1
    %1678 = vsyncpa %s1677, 1
    %1679 = vsyncpa [#allocation5], 1
    %s1680 = scalar_lea.sflag [#allocation5], 1
    %1681 = vsyncpa %s1680, 1

</llo_original>
